<compile_context>
chip_gen: v7x
topology: tpu7x:2x2x1
jax: 0.10.0
libtpu: 0.0.40
codegen_flags: <defaults>
</compile_context>

<pallas_src>
import functools

import jax
import jax.numpy as jnp
from jax import lax
from jax.experimental import pallas as pl
from jax.experimental.pallas import tpu as pltpu


# ----------------------------------------------------------------------------
# Helpers
# ----------------------------------------------------------------------------
def _fold_bn(gamma, beta, mean, var, eps=1e-5):
    s = gamma / jnp.sqrt(var + eps)
    return s, beta - mean * s


def _pad_phases_nchw(x):
    """x: (N, C, H, W) -> (N, 4, C, H//2+1, W//2+1) phases of the padded input."""
    N, C, H, W = x.shape
    assert H % 2 == 0 and W % 2 == 0
    Ho, Wo = H // 2, W // 2
    xp = jnp.pad(x, ((0, 0), (0, 0), (1, 1), (1, 1)))
    phases = [xp[:, :, p:p + 2 * Ho + 1:2, q:q + 2 * Wo + 1:2]
              for p in (0, 1) for q in (0, 1)]
    return jnp.stack(phases, axis=1)


def _pad_phases_nhwc(x):
    """x: (N, H, W, C) -> (N, 4, H//2+1, W//2+1, C) phases of the padded input."""
    N, H, W, C = x.shape
    assert H % 2 == 0 and W % 2 == 0
    Ho, Wo = H // 2, W // 2
    xp = jnp.pad(x, ((0, 0), (1, 1), (1, 1), (0, 0)))
    phases = [xp[:, p:p + 2 * Ho + 1:2, q:q + 2 * Wo + 1:2, :]
              for p in (0, 1) for q in (0, 1)]
    return jnp.stack(phases, axis=1)


# ----------------------------------------------------------------------------
# Channel-major (NCHW) DWBlock kernel for the early blocks (Cin = 1/32/64):
# spatial is the lane dim, pointwise conv = (Cout,Cin) @ (Cin, Ho*Wo) on MXU,
# output store is lane-dense over Ho*Wo.
# ----------------------------------------------------------------------------
def dwblock_nchw_kernel(x_ref, wdw_ref, s1_ref, b1_ref, wpwT_ref, s2_ref,
                        b2_ref, o_ref, *, Ho, Wo, Cin, stride):
    # x_ref: stride==1 -> (1, Cin, Ho+2, Wo+2) padded input
    #        stride==2 -> (1, 4, Cin, Ho+1, Wo+1) padded + 2x2 phase split
    wdw = wdw_ref[...].astype(jnp.float32)                      # (9, Cin)

    # 3x3 depthwise conv; one partial accumulator per kernel row.
    parts = []
    for ky in range(3):
        part = None
        for kx in range(3):
            if stride == 1:
                win = x_ref[0, :, ky:ky + Ho, kx:kx + Wo]        # (Cin, Ho, Wo)
            else:
                ph = (ky % 2) * 2 + (kx % 2)
                dy, dx = ky // 2, kx // 2
                win = x_ref[0, ph, :, dy:dy + Ho, dx:dx + Wo]    # (Cin, Ho, Wo)
            tap = win.astype(jnp.float32) * wdw[ky * 3 + kx][:, None, None]
            part = tap if part is None else part + tap
        parts.append(part)
    acc = (parts[0] + parts[1]) + parts[2]                       # (Cin, Ho, Wo)

    # Folded BatchNorm (eval) + ReLU6 on the flattened (Cin, Ho*Wo) slab.
    y = acc.reshape(Cin, Ho * Wo)
    y = jnp.clip(y * s1_ref[...] + b1_ref[...], 0.0, 6.0)       # s1/b1: (Cin,1)

    # Pointwise 1x1 conv on the MXU, bf16 operands, f32 accumulation.
    yb = y.astype(jnp.bfloat16)
    w = wpwT_ref[...]                                            # (Cout, Cin) bf16
    if Cin == 1:
        z = w.astype(jnp.float32) * yb.astype(jnp.float32)       # outer product
    else:
        z = jnp.dot(w, yb, preferred_element_type=jnp.float32)   # (Cout, Ho*Wo)

    z = jnp.clip(z * s2_ref[...] + b2_ref[...], 0.0, 6.0)        # s2/b2: (Cout,1)
    o_ref[0] = z.astype(o_ref.dtype)


def dwblock_nchw(x, params, stride):
    """x: (N, Cin, H, W) channel-major -> (N, Cout, Ho, Wo) (Pallas)."""
    (w_dw, g1, be1, m1, v1, w_pw, g2, be2, m2, v2) = params
    s1, b1 = _fold_bn(g1, be1, m1, v1)
    s2, b2 = _fold_bn(g2, be2, m2, v2)

    N, Cin, H, W = x.shape
    Cout = w_pw.shape[-1]
    Ho = (H - 1) // stride + 1
    Wo = (W - 1) // stride + 1

    wdw = w_dw.reshape(9, Cin)
    wpwT = jnp.transpose(w_pw).astype(jnp.bfloat16)              # (Cout, Cin)

    if stride == 1:
        xin = jnp.pad(x, ((0, 0), (0, 0), (1, 1), (1, 1)))
        x_spec = pl.BlockSpec((1, Cin, Ho + 2, Wo + 2), lambda n: (n, 0, 0, 0))
    else:
        xin = _pad_phases_nchw(x)                                # (N,4,Cin,Ho+1,Wo+1)
        x_spec = pl.BlockSpec((1, 4, Cin, Ho + 1, Wo + 1),
                              lambda n: (n, 0, 0, 0, 0))

    kernel = functools.partial(dwblock_nchw_kernel, Ho=Ho, Wo=Wo, Cin=Cin,
                               stride=stride)
    out = pl.pallas_call(
        kernel,
        out_shape=jax.ShapeDtypeStruct((N, Cout, Ho * Wo), x.dtype),
        grid_spec=pltpu.PrefetchScalarGridSpec(
            num_scalar_prefetch=0,
            grid=(N,),
            in_specs=[
                x_spec,
                pl.BlockSpec((9, Cin), lambda n: (0, 0)),
                pl.BlockSpec((Cin, 1), lambda n: (0, 0)),
                pl.BlockSpec((Cin, 1), lambda n: (0, 0)),
                pl.BlockSpec((Cout, Cin), lambda n: (0, 0)),
                pl.BlockSpec((Cout, 1), lambda n: (0, 0)),
                pl.BlockSpec((Cout, 1), lambda n: (0, 0)),
            ],
            out_specs=pl.BlockSpec((1, Cout, Ho * Wo), lambda n: (n, 0, 0)),
        ),
        compiler_params=pltpu.CompilerParams(
            dimension_semantics=("parallel",)),
    )(xin, wdw, s1.reshape(Cin, 1), b1.reshape(Cin, 1), wpwT,
      s2.reshape(Cout, 1), b2.reshape(Cout, 1))
    return out.reshape(N, Cout, Ho, Wo)


# ----------------------------------------------------------------------------
# Channel-last (NHWC) DWBlock kernel for the deep blocks (stride 2, C >= 128),
# whole batch in one step (M = N*Ho*Wo), optional fused cls|reg head.
# ----------------------------------------------------------------------------
def _dwblock_nhwc_body(xph_ref, wdw_ref, s1_ref, b1_ref, wpw_ref, s2_ref,
                       b2_ref, *, N, Ho, Wo, Cin):
    wdw = wdw_ref[...].astype(jnp.float32)                       # (9, Cin)
    parts = []
    for ky in range(3):
        part = None
        for kx in range(3):
            ph = (ky % 2) * 2 + (kx % 2)
            dy, dx = ky // 2, kx // 2
            win = xph_ref[:, ph, dy:dy + Ho, dx:dx + Wo, :]      # (N, Ho, Wo, Cin)
            tap = win.astype(jnp.float32) * wdw[ky * 3 + kx]
            part = tap if part is None else part + tap
        parts.append(part)
    acc = (parts[0] + parts[1]) + parts[2]                       # (N, Ho, Wo, Cin)

    y = jnp.clip(acc * s1_ref[0] + b1_ref[0], 0.0, 6.0)
    yb = y.reshape(N * Ho * Wo, Cin).astype(jnp.bfloat16)
    z = jnp.dot(yb, wpw_ref[...], preferred_element_type=jnp.float32)
    return jnp.clip(z * s2_ref[0] + b2_ref[0], 0.0, 6.0)         # (N*HW, Cout)


def dwblock_nhwc_kernel(xph_ref, wdw_ref, s1_ref, b1_ref, wpw_ref, s2_ref,
                        b2_ref, o_ref, *, N, Ho, Wo, Cin):
    f = _dwblock_nhwc_body(xph_ref, wdw_ref, s1_ref, b1_ref, wpw_ref, s2_ref,
                           b2_ref, N=N, Ho=Ho, Wo=Wo, Cin=Cin)
    o_ref[...] = f.reshape(o_ref.shape).astype(o_ref.dtype)


def dwblock_nhwc_head_kernel(xph_ref, wdw_ref, s1_ref, b1_ref, wpw_ref, s2_ref,
                             b2_ref, wh_ref, bh_ref, feat_ref, head_ref,
                             *, N, Ho, Wo, Cin):
    f = _dwblock_nhwc_body(xph_ref, wdw_ref, s1_ref, b1_ref, wpw_ref, s2_ref,
                           b2_ref, N=N, Ho=Ho, Wo=Wo, Cin=Cin)
    feat_ref[...] = f.reshape(feat_ref.shape).astype(feat_ref.dtype)
    # Fused cls|reg head: one matmul over the concatenated head weight.
    h = jnp.dot(f.astype(jnp.bfloat16), wh_ref[...],
                preferred_element_type=jnp.float32) + bh_ref[0]
    head_ref[...] = h.reshape(head_ref.shape).astype(head_ref.dtype)


def dwblock_nhwc(x, params, head_wb=None):
    """x: (N, H, W, Cin) NHWC, stride fixed to 2.
    Returns (feature (N, Ho, Wo, Cout), head (N, Ho*Wo, Kh) or None)."""
    (w_dw, g1, be1, m1, v1, w_pw, g2, be2, m2, v2) = params
    s1, b1 = _fold_bn(g1, be1, m1, v1)
    s2, b2 = _fold_bn(g2, be2, m2, v2)

    N, H, W, Cin = x.shape
    Cout = w_pw.shape[-1]
    Ho, Wo = H // 2, W // 2
    HW = Ho * Wo

    xph = _pad_phases_nhwc(x)                                    # (N,4,Ho+1,Wo+1,Cin)
    wdw = w_dw.reshape(9, Cin)
    wpw = w_pw.astype(jnp.bfloat16)

    in_specs = [
        pl.BlockSpec((N, 4, Ho + 1, Wo + 1, Cin), lambda i: (0, 0, 0, 0, 0)),
        pl.BlockSpec((9, Cin), lambda i: (0, 0)),
        pl.BlockSpec((1, Cin), lambda i: (0, 0)),
        pl.BlockSpec((1, Cin), lambda i: (0, 0)),
        pl.BlockSpec((Cin, Cout), lambda i: (0, 0)),
        pl.BlockSpec((1, Cout), lambda i: (0, 0)),
        pl.BlockSpec((1, Cout), lambda i: (0, 0)),
    ]
    args = (xph, wdw, s1.reshape(1, Cin), b1.reshape(1, Cin), wpw,
            s2.reshape(1, Cout), b2.reshape(1, Cout))

    if head_wb is None:
        kernel = functools.partial(dwblock_nhwc_kernel, N=N, Ho=Ho, Wo=Wo,
                                   Cin=Cin)
        out = pl.pallas_call(
            kernel,
            out_shape=jax.ShapeDtypeStruct((N, HW, Cout), x.dtype),
            grid_spec=pltpu.PrefetchScalarGridSpec(
                num_scalar_prefetch=0, grid=(1,),
                in_specs=in_specs,
                out_specs=pl.BlockSpec((N, HW, Cout), lambda i: (0, 0, 0)),
            ),
            compiler_params=pltpu.CompilerParams(
                dimension_semantics=("arbitrary",)),
        )(*args)
        return out.reshape(N, Ho, Wo, Cout), None

    wh, bh = head_wb
    Kh = wh.shape[-1]
    kernel = functools.partial(dwblock_nhwc_head_kernel, N=N, Ho=Ho, Wo=Wo,
                               Cin=Cin)
    feat, head = pl.pallas_call(
        kernel,
        out_shape=(jax.ShapeDtypeStruct((N, HW, Cout), x.dtype),
                   jax.ShapeDtypeStruct((N, HW, Kh), x.dtype)),
        grid_spec=pltpu.PrefetchScalarGridSpec(
            num_scalar_prefetch=0, grid=(1,),
            in_specs=in_specs + [
                pl.BlockSpec((Cout, Kh), lambda i: (0, 0)),
                pl.BlockSpec((1, Kh), lambda i: (0, 0)),
            ],
            out_specs=(pl.BlockSpec((N, HW, Cout), lambda i: (0, 0, 0)),
                       pl.BlockSpec((N, HW, Kh), lambda i: (0, 0, 0))),
        ),
        compiler_params=pltpu.CompilerParams(
            dimension_semantics=("arbitrary",)),
    )(*args, wh.astype(jnp.bfloat16), bh.reshape(1, Kh))
    return feat.reshape(N, Ho, Wo, Cout), head


# ----------------------------------------------------------------------------
# Detection forward (Pallas)
# ----------------------------------------------------------------------------
def detection_forward(x_nchw, backbone_params, backbone_strides, head_params,
                      num_anchors_per_scale, num_classes):
    N = x_nchw.shape[0]

    # Blocks 0-2: channel-major (spatial in lanes, Cin = 1/32/64).  The NCHW
    # model input is already in this layout -> no initial transpose.
    x = x_nchw
    for i in range(3):
        x = dwblock_nchw(x, backbone_params[i], backbone_strides[i])

    # Switch to channel-last for the deep blocks (C >= 128 >= HW).
    x = jnp.transpose(x, (0, 2, 3, 1))                           # (N, H, W, C)

    assert all(s == 2 for s in backbone_strides[3:])
    x, _ = dwblock_nhwc(x, backbone_params[3])                   # block 3

    # Blocks 4 and 5 with the cls|reg heads fused into their epilogues.
    (wc0, bc0, wr0, br0), (wc1, bc1, wr1, br1) = head_params
    wh0 = jnp.concatenate([wc0, wr0], axis=1)
    bh0 = jnp.concatenate([bc0, br0])
    wh1 = jnp.concatenate([wc1, wr1], axis=1)
    bh1 = jnp.concatenate([bc1, br1])

    feat4, head4 = dwblock_nhwc(x, backbone_params[4], head_wb=(wh0, bh0))
    _, head5 = dwblock_nhwc(feat4, backbone_params[5], head_wb=(wh1, bh1))

    Kc0, Kc1 = wc0.shape[-1], wc1.shape[-1]
    cls4, reg4 = head4[..., :Kc0], head4[..., Kc0:]
    cls5, reg5 = head5[..., :Kc1], head5[..., Kc1:]

    # Keep (N, HW, A*k) until after concatenation; one reshape at the end.
    # (Assumes head out-channels are anchor-major, matching torch conv order.)
    if cls4.shape[-1] == cls5.shape[-1]:
        cls = jnp.concatenate([cls4, cls5], axis=1).reshape(N, -1, num_classes)
    else:
        cls = jnp.concatenate([cls4.reshape(N, -1, num_classes),
                               cls5.reshape(N, -1, num_classes)], axis=1)
    if reg4.shape[-1] == reg5.shape[-1]:
        reg = jnp.concatenate([reg4, reg5], axis=1).reshape(N, -1, 4)
    else:
        reg = jnp.concatenate([reg4.reshape(N, -1, 4),
                               reg5.reshape(N, -1, 4)], axis=1)
    return cls, reg


# ----------------------------------------------------------------------------
# Pure-JAX reference (eval-mode BN folded; same bf16 rounding of the MXU
# matmul operands so the comparison isolates kernel correctness).
# ----------------------------------------------------------------------------
def dwblock_reference(x, params, stride=1):
    (w_dw, g1, be1, m1, v1, w_pw, g2, be2, m2, v2) = params
    eps = 1e-5
    Cin = x.shape[-1]
    y = lax.conv_general_dilated(
        x, w_dw.reshape(3, 3, 1, Cin), (stride, stride), ((1, 1), (1, 1)),
        dimension_numbers=('NHWC', 'HWIO', 'NHWC'),
        feature_group_count=Cin, precision=lax.Precision.HIGHEST)
    s1 = g1 / jnp.sqrt(v1 + eps)
    y = jnp.clip(y * s1 + (be1 - m1 * s1), 0.0, 6.0)
    y = y.astype(jnp.bfloat16).astype(jnp.float32)               # match kernel
    w_pw_f = w_pw.astype(jnp.float32)
    z = lax.conv_general_dilated(
        y, w_pw_f.reshape(1, 1, *w_pw.shape), (1, 1), ((0, 0), (0, 0)),
        dimension_numbers=('NHWC', 'HWIO', 'NHWC'),
        precision=lax.Precision.HIGHEST)
    s2 = g2 / jnp.sqrt(v2 + eps)
    return jnp.clip(z * s2 + (be2 - m2 * s2), 0.0, 6.0)


def detection_reference(x_nchw, backbone_params, backbone_strides, head_params,
                        num_anchors_per_scale, num_classes):
    x = jnp.transpose(x_nchw, (0, 2, 3, 1))
    feats = []
    for i, (params, stride) in enumerate(zip(backbone_params, backbone_strides)):
        x = dwblock_reference(x, params, stride=stride)
        if i in (4, 5):
            feats.append(x)
    cls_list, reg_list = [], []
    for feat, (wc, bc, wr, br), A in zip(feats, head_params,
                                         num_anchors_per_scale):
        n, h, w, c = feat.shape
        f = feat.reshape(n, h * w, c)
        f = f.astype(jnp.bfloat16).astype(jnp.float32)           # match kernel
        cls = jnp.einsum('nsc,ck->nsk', f, wc.astype(jnp.float32),
                         precision=lax.Precision.HIGHEST) + bc
        reg = jnp.einsum('nsc,ck->nsk', f, wr.astype(jnp.float32),
                         precision=lax.Precision.HIGHEST) + br
        cls_list.append(cls.reshape(n, h * w * A, num_classes))
        reg_list.append(reg.reshape(n, h * w * A, 4))
    return (jnp.concatenate(cls_list, axis=1),
            jnp.concatenate(reg_list, axis=1))


# ----------------------------------------------------------------------------
# Test harness
# ----------------------------------------------------------------------------
def make_dwblock_params(key, cin, cout):
    ks = jax.random.split(key, 10)
    w_dw = (1.0 / 3.0) * jax.random.normal(ks[0], (3, 3, cin), jnp.float32)
    # Pointwise weight stored bf16 (halves its HBM traffic; values exact in f32).
    w_pw = (((2.0 / cin) ** 0.5) *
            jax.random.normal(ks[1], (cin, cout), jnp.float32)
            ).astype(jnp.bfloat16)
    g1 = 1.0 + 0.1 * jax.random.normal(ks[2], (cin,), jnp.float32)
    be1 = 0.1 * jax.random.normal(ks[3], (cin,), jnp.float32)
    m1 = 0.05 * jax.random.normal(ks[4], (cin,), jnp.float32)
    v1 = jnp.abs(1.0 + 0.1 * jax.random.normal(ks[5], (cin,), jnp.float32))
    g2 = 1.0 + 0.1 * jax.random.normal(ks[6], (cout,), jnp.float32)
    be2 = 0.1 * jax.random.normal(ks[7], (cout,), jnp.float32)
    m2 = 0.05 * jax.random.normal(ks[8], (cout,), jnp.float32)
    v2 = jnp.abs(1.0 + 0.1 * jax.random.normal(ks[9], (cout,), jnp.float32))
    # eval-mode BatchNorm semantics (running stats).
    return (w_dw, g1, be1, m1, v1, w_pw, g2, be2, m2, v2)


if __name__ == "__main__":
    key = jax.random.PRNGKey(0)

    num_classes = 2
    num_anchors_per_scale = [9, 9]          # len(sizes) * len(aspect_ratios)
    block_cfg = [(1, 32, 2), (32, 64, 1), (64, 128, 2),
                 (128, 256, 2), (256, 512, 2), (512, 1024, 2)]
    feat_channels = [512, 1024]
    N, H, W = 2, 64, 64                      # -> 4x4 and 2x2 head feature maps

    keys = jax.random.split(key, 1 + len(block_cfg) + len(feat_channels))
    x = jax.random.normal(keys[0], (N, 1, H, W), jnp.float32)

    backbone_params, backbone_strides = [], []
    for (cin, cout, s), k in zip(block_cfg, keys[1:1 + len(block_cfg)]):
        backbone_params.append(make_dwblock_params(k, cin, cout))
        backbone_strides.append(s)

    head_params = []
    for c, a, k in zip(feat_channels, num_anchors_per_scale,
                       keys[1 + len(block_cfg):]):
        hk = jax.random.split(k, 4)
        head_params.append((
            (0.05 * jax.random.normal(hk[0], (c, a * num_classes), jnp.float32)
             ).astype(jnp.bfloat16),
            0.1 * jax.random.normal(hk[1], (a * num_classes,), jnp.float32),
            (0.05 * jax.random.normal(hk[2], (c, a * 4), jnp.float32)
             ).astype(jnp.bfloat16),
            0.1 * jax.random.normal(hk[3], (a * 4,), jnp.float32)))

    cls_out, reg_out = detection_forward(
        x, backbone_params, backbone_strides, head_params,
        num_anchors_per_scale, num_classes)
    cls_out, reg_out = jax.block_until_ready((cls_out, reg_out))

    cls_ref, reg_ref = detection_reference(
        x, backbone_params, backbone_strides, head_params,
        num_anchors_per_scale, num_classes)
    cls_ref, reg_ref = jax.block_until_ready((cls_ref, reg_ref))

    assert cls_out.shape == cls_ref.shape == (N, (16 + 4) * 9, num_classes)
    assert reg_out.shape == reg_ref.shape == (N, (16 + 4) * 9, 4)
    # Tolerance covers rare bf16 boundary-rounding divergences of the MXU
    # operands; real kernel bugs produce O(1) errors.
    assert jnp.allclose(cls_out, cls_ref, atol=3e-2, rtol=3e-2), \
        float(jnp.max(jnp.abs(cls_out - cls_ref)))
    assert jnp.allclose(reg_out, reg_ref, atol=3e-2, rtol=3e-2), \
        float(jnp.max(jnp.abs(reg_out - reg_ref)))

    print("KERNEL_OK")
</pallas_src>

<mosaic_0001>
module attributes {stable_mosaic.version = 11 : i64} {
  func.func @dwblock_nchw_kernel(%arg0: i32, %arg1: memref<1x4x1x33x33xf32, #tpu.memory_space<vmem>>, %arg2: memref<9x1xf32, #tpu.memory_space<vmem>>, %arg3: memref<1x1xf32, #tpu.memory_space<vmem>>, %arg4: memref<1x1xf32, #tpu.memory_space<vmem>>, %arg5: memref<32x1xbf16, #tpu.memory_space<vmem>>, %arg6: memref<32x1xf32, #tpu.memory_space<vmem>>, %arg7: memref<32x1xf32, #tpu.memory_space<vmem>>, %arg8: memref<1x32x1024xf32, #tpu.memory_space<vmem>>) attributes {dimension_semantics = [#tpu.dimension_semantics<parallel>], iteration_bounds = array<i64: 2>, scalar_prefetch = 0 : i64, scratch_operands = 0 : i64, tpu.core_type = #tpu.core_type<tc>, window_params = [{transform_indices = @transform_0, window_bounds = array<i64: 1, 4, 1, 33, 33>}, {pipeline_mode = #tpu.pipeline_mode<synchronous>, transform_indices = @transform_1, window_bounds = array<i64: 9, 1>}, {pipeline_mode = #tpu.pipeline_mode<synchronous>, transform_indices = @transform_2, window_bounds = array<i64: 1, 1>}, {pipeline_mode = #tpu.pipeline_mode<synchronous>, transform_indices = @transform_3, window_bounds = array<i64: 1, 1>}, {pipeline_mode = #tpu.pipeline_mode<synchronous>, transform_indices = @transform_4, window_bounds = array<i64: 32, 1>}, {pipeline_mode = #tpu.pipeline_mode<synchronous>, transform_indices = @transform_5, window_bounds = array<i64: 32, 1>}, {pipeline_mode = #tpu.pipeline_mode<synchronous>, transform_indices = @transform_6, window_bounds = array<i64: 32, 1>}, {transform_indices = @transform_7, window_bounds = array<i64: 1, 32, 1024>}]} {
    %c0 = arith.constant 0 : index
    %c0_0 = arith.constant 0 : index
    %0 = vector.load %arg2[%c0, %c0_0] : memref<9x1xf32, #tpu.memory_space<vmem>>, vector<9x1xf32>
    %c0_1 = arith.constant 0 : index
    %c0_2 = arith.constant 0 : index
    %c0_3 = arith.constant 0 : index
    %c0_4 = arith.constant 0 : index
    %c0_5 = arith.constant 0 : index
    %1 = vector.load %arg1[%c0_1, %c0_2, %c0_3, %c0_4, %c0_5] : memref<1x4x1x33x33xf32, #tpu.memory_space<vmem>>, vector<1x1x1x32x32xf32>
    %2 = vector.shape_cast %1 : vector<1x1x1x32x32xf32> to vector<1x32x32xf32>
    %3 = vector.extract_strided_slice %0 {offsets = [0, 0], sizes = [1, 1], strides = [1, 1]} : vector<9x1xf32> to vector<1x1xf32>
    %4 = vector.shape_cast %3 : vector<1x1xf32> to vector<1xf32>
    %5 = vector.shape_cast %4 : vector<1xf32> to vector<1x1x1xf32>
    %6 = vector.broadcast %5 : vector<1x1x1xf32> to vector<1x32x32xf32>
    %7 = arith.mulf %2, %6 : vector<1x32x32xf32>
    %c0_6 = arith.constant 0 : index
    %c1 = arith.constant 1 : index
    %c0_7 = arith.constant 0 : index
    %c0_8 = arith.constant 0 : index
    %c0_9 = arith.constant 0 : index
    %8 = vector.load %arg1[%c0_6, %c1, %c0_7, %c0_8, %c0_9] : memref<1x4x1x33x33xf32, #tpu.memory_space<vmem>>, vector<1x1x1x32x32xf32>
    %9 = vector.shape_cast %8 : vector<1x1x1x32x32xf32> to vector<1x32x32xf32>
    %10 = vector.extract_strided_slice %0 {offsets = [1, 0], sizes = [1, 1], strides = [1, 1]} : vector<9x1xf32> to vector<1x1xf32>
    %11 = vector.shape_cast %10 : vector<1x1xf32> to vector<1xf32>
    %12 = vector.shape_cast %11 : vector<1xf32> to vector<1x1x1xf32>
    %13 = vector.broadcast %12 : vector<1x1x1xf32> to vector<1x32x32xf32>
    %14 = arith.mulf %9, %13 : vector<1x32x32xf32>
    %15 = arith.addf %7, %14 : vector<1x32x32xf32>
    %c0_10 = arith.constant 0 : index
    %c0_11 = arith.constant 0 : index
    %c0_12 = arith.constant 0 : index
    %c0_13 = arith.constant 0 : index
    %c1_14 = arith.constant 1 : index
    %16 = vector.load %arg1[%c0_10, %c0_11, %c0_12, %c0_13, %c1_14] : memref<1x4x1x33x33xf32, #tpu.memory_space<vmem>>, vector<1x1x1x32x32xf32>
    %17 = vector.shape_cast %16 : vector<1x1x1x32x32xf32> to vector<1x32x32xf32>
    %18 = vector.extract_strided_slice %0 {offsets = [2, 0], sizes = [1, 1], strides = [1, 1]} : vector<9x1xf32> to vector<1x1xf32>
    %19 = vector.shape_cast %18 : vector<1x1xf32> to vector<1xf32>
    %20 = vector.shape_cast %19 : vector<1xf32> to vector<1x1x1xf32>
    %21 = vector.broadcast %20 : vector<1x1x1xf32> to vector<1x32x32xf32>
    %22 = arith.mulf %17, %21 : vector<1x32x32xf32>
    %23 = arith.addf %15, %22 : vector<1x32x32xf32>
    %c0_15 = arith.constant 0 : index
    %c2 = arith.constant 2 : index
    %c0_16 = arith.constant 0 : index
    %c0_17 = arith.constant 0 : index
    %c0_18 = arith.constant 0 : index
    %24 = vector.load %arg1[%c0_15, %c2, %c0_16, %c0_17, %c0_18] : memref<1x4x1x33x33xf32, #tpu.memory_space<vmem>>, vector<1x1x1x32x32xf32>
    %25 = vector.shape_cast %24 : vector<1x1x1x32x32xf32> to vector<1x32x32xf32>
    %26 = vector.extract_strided_slice %0 {offsets = [3, 0], sizes = [1, 1], strides = [1, 1]} : vector<9x1xf32> to vector<1x1xf32>
    %27 = vector.shape_cast %26 : vector<1x1xf32> to vector<1xf32>
    %28 = vector.shape_cast %27 : vector<1xf32> to vector<1x1x1xf32>
    %29 = vector.broadcast %28 : vector<1x1x1xf32> to vector<1x32x32xf32>
    %30 = arith.mulf %25, %29 : vector<1x32x32xf32>
    %c0_19 = arith.constant 0 : index
    %c3 = arith.constant 3 : index
    %c0_20 = arith.constant 0 : index
    %c0_21 = arith.constant 0 : index
    %c0_22 = arith.constant 0 : index
    %31 = vector.load %arg1[%c0_19, %c3, %c0_20, %c0_21, %c0_22] : memref<1x4x1x33x33xf32, #tpu.memory_space<vmem>>, vector<1x1x1x32x32xf32>
    %32 = vector.shape_cast %31 : vector<1x1x1x32x32xf32> to vector<1x32x32xf32>
    %33 = vector.extract_strided_slice %0 {offsets = [4, 0], sizes = [1, 1], strides = [1, 1]} : vector<9x1xf32> to vector<1x1xf32>
    %34 = vector.shape_cast %33 : vector<1x1xf32> to vector<1xf32>
    %35 = vector.shape_cast %34 : vector<1xf32> to vector<1x1x1xf32>
    %36 = vector.broadcast %35 : vector<1x1x1xf32> to vector<1x32x32xf32>
    %37 = arith.mulf %32, %36 : vector<1x32x32xf32>
    %38 = arith.addf %30, %37 : vector<1x32x32xf32>
    %c0_23 = arith.constant 0 : index
    %c2_24 = arith.constant 2 : index
    %c0_25 = arith.constant 0 : index
    %c0_26 = arith.constant 0 : index
    %c1_27 = arith.constant 1 : index
    %39 = vector.load %arg1[%c0_23, %c2_24, %c0_25, %c0_26, %c1_27] : memref<1x4x1x33x33xf32, #tpu.memory_space<vmem>>, vector<1x1x1x32x32xf32>
    %40 = vector.shape_cast %39 : vector<1x1x1x32x32xf32> to vector<1x32x32xf32>
    %41 = vector.extract_strided_slice %0 {offsets = [5, 0], sizes = [1, 1], strides = [1, 1]} : vector<9x1xf32> to vector<1x1xf32>
    %42 = vector.shape_cast %41 : vector<1x1xf32> to vector<1xf32>
    %43 = vector.shape_cast %42 : vector<1xf32> to vector<1x1x1xf32>
    %44 = vector.broadcast %43 : vector<1x1x1xf32> to vector<1x32x32xf32>
    %45 = arith.mulf %40, %44 : vector<1x32x32xf32>
    %46 = arith.addf %38, %45 : vector<1x32x32xf32>
    %c0_28 = arith.constant 0 : index
    %c0_29 = arith.constant 0 : index
    %c0_30 = arith.constant 0 : index
    %c1_31 = arith.constant 1 : index
    %c0_32 = arith.constant 0 : index
    %47 = vector.load %arg1[%c0_28, %c0_29, %c0_30, %c1_31, %c0_32] : memref<1x4x1x33x33xf32, #tpu.memory_space<vmem>>, vector<1x1x1x32x32xf32>
    %48 = vector.shape_cast %47 : vector<1x1x1x32x32xf32> to vector<1x32x32xf32>
    %49 = vector.extract_strided_slice %0 {offsets = [6, 0], sizes = [1, 1], strides = [1, 1]} : vector<9x1xf32> to vector<1x1xf32>
    %50 = vector.shape_cast %49 : vector<1x1xf32> to vector<1xf32>
    %51 = vector.shape_cast %50 : vector<1xf32> to vector<1x1x1xf32>
    %52 = vector.broadcast %51 : vector<1x1x1xf32> to vector<1x32x32xf32>
    %53 = arith.mulf %48, %52 : vector<1x32x32xf32>
    %c0_33 = arith.constant 0 : index
    %c1_34 = arith.constant 1 : index
    %c0_35 = arith.constant 0 : index
    %c1_36 = arith.constant 1 : index
    %c0_37 = arith.constant 0 : index
    %54 = vector.load %arg1[%c0_33, %c1_34, %c0_35, %c1_36, %c0_37] : memref<1x4x1x33x33xf32, #tpu.memory_space<vmem>>, vector<1x1x1x32x32xf32>
    %55 = vector.shape_cast %54 : vector<1x1x1x32x32xf32> to vector<1x32x32xf32>
    %56 = vector.extract_strided_slice %0 {offsets = [7, 0], sizes = [1, 1], strides = [1, 1]} : vector<9x1xf32> to vector<1x1xf32>
    %57 = vector.shape_cast %56 : vector<1x1xf32> to vector<1xf32>
    %58 = vector.shape_cast %57 : vector<1xf32> to vector<1x1x1xf32>
    %59 = vector.broadcast %58 : vector<1x1x1xf32> to vector<1x32x32xf32>
    %60 = arith.mulf %55, %59 : vector<1x32x32xf32>
    %61 = arith.addf %53, %60 : vector<1x32x32xf32>
    %c0_38 = arith.constant 0 : index
    %c0_39 = arith.constant 0 : index
    %c0_40 = arith.constant 0 : index
    %c1_41 = arith.constant 1 : index
    %c1_42 = arith.constant 1 : index
    %62 = vector.load %arg1[%c0_38, %c0_39, %c0_40, %c1_41, %c1_42] : memref<1x4x1x33x33xf32, #tpu.memory_space<vmem>>, vector<1x1x1x32x32xf32>
    %63 = vector.shape_cast %62 : vector<1x1x1x32x32xf32> to vector<1x32x32xf32>
    %64 = vector.extract_strided_slice %0 {offsets = [8, 0], sizes = [1, 1], strides = [1, 1]} : vector<9x1xf32> to vector<1x1xf32>
    %65 = vector.shape_cast %64 : vector<1x1xf32> to vector<1xf32>
    %66 = vector.shape_cast %65 : vector<1xf32> to vector<1x1x1xf32>
    %67 = vector.broadcast %66 : vector<1x1x1xf32> to vector<1x32x32xf32>
    %68 = arith.mulf %63, %67 : vector<1x32x32xf32>
    %69 = arith.addf %61, %68 : vector<1x32x32xf32>
    %70 = arith.addf %23, %46 : vector<1x32x32xf32>
    %71 = arith.addf %70, %69 : vector<1x32x32xf32>
    %72 = vector.shape_cast %71 : vector<1x32x32xf32> to vector<1x1024xf32>
    %c0_43 = arith.constant 0 : index
    %c0_44 = arith.constant 0 : index
    %73 = vector.load %arg3[%c0_43, %c0_44] : memref<1x1xf32, #tpu.memory_space<vmem>>, vector<1x1xf32>
    %74 = vector.broadcast %73 : vector<1x1xf32> to vector<1x1024xf32>
    %75 = arith.mulf %72, %74 : vector<1x1024xf32>
    %c0_45 = arith.constant 0 : index
    %c0_46 = arith.constant 0 : index
    %76 = vector.load %arg4[%c0_45, %c0_46] : memref<1x1xf32, #tpu.memory_space<vmem>>, vector<1x1xf32>
    %77 = vector.broadcast %76 : vector<1x1xf32> to vector<1x1024xf32>
    %78 = arith.addf %75, %77 : vector<1x1024xf32>
    %cst = arith.constant 0.000000e+00 : f32
    %cst_47 = arith.constant 6.000000e+00 : f32
    %79 = vector.broadcast %cst : f32 to vector<1x1024xf32>
    %80 = arith.maximumf %79, %78 : vector<1x1024xf32>
    %81 = vector.broadcast %cst_47 : f32 to vector<1x1024xf32>
    %82 = arith.minimumf %81, %80 : vector<1x1024xf32>
    %83 = arith.truncf %82 : vector<1x1024xf32> to vector<1x1024xbf16>
    %c0_48 = arith.constant 0 : index
    %c0_49 = arith.constant 0 : index
    %84 = vector.load %arg5[%c0_48, %c0_49] : memref<32x1xbf16, #tpu.memory_space<vmem>>, vector<32x1xbf16>
    %85 = arith.extf %84 : vector<32x1xbf16> to vector<32x1xf32>
    %86 = arith.extf %83 : vector<1x1024xbf16> to vector<1x1024xf32>
    %87 = vector.broadcast %85 : vector<32x1xf32> to vector<32x1024xf32>
    %88 = vector.broadcast %86 : vector<1x1024xf32> to vector<32x1024xf32>
    %89 = arith.mulf %87, %88 : vector<32x1024xf32>
    %c0_50 = arith.constant 0 : index
    %c0_51 = arith.constant 0 : index
    %90 = vector.load %arg6[%c0_50, %c0_51] : memref<32x1xf32, #tpu.memory_space<vmem>>, vector<32x1xf32>
    %91 = vector.broadcast %90 : vector<32x1xf32> to vector<32x1024xf32>
    %92 = arith.mulf %89, %91 : vector<32x1024xf32>
    %c0_52 = arith.constant 0 : index
    %c0_53 = arith.constant 0 : index
    %93 = vector.load %arg7[%c0_52, %c0_53] : memref<32x1xf32, #tpu.memory_space<vmem>>, vector<32x1xf32>
    %94 = vector.broadcast %93 : vector<32x1xf32> to vector<32x1024xf32>
    %95 = arith.addf %92, %94 : vector<32x1024xf32>
    %cst_54 = arith.constant 0.000000e+00 : f32
    %cst_55 = arith.constant 6.000000e+00 : f32
    %96 = vector.broadcast %cst_54 : f32 to vector<32x1024xf32>
    %97 = arith.maximumf %96, %95 : vector<32x1024xf32>
    %98 = vector.broadcast %cst_55 : f32 to vector<32x1024xf32>
    %99 = arith.minimumf %98, %97 : vector<32x1024xf32>
    %c0_56 = arith.constant 0 : index
    %c0_57 = arith.constant 0 : index
    %c0_58 = arith.constant 0 : index
    %100 = vector.load %arg8[%c0_56, %c0_57, %c0_58] : memref<1x32x1024xf32, #tpu.memory_space<vmem>>, vector<1x32x1024xf32>
    %101 = vector.shape_cast %100 : vector<1x32x1024xf32> to vector<32x1024xf32>
    %102 = vector.shape_cast %99 : vector<32x1024xf32> to vector<1x32x1024xf32>
    tpu.vector_store %arg8[%c0_56, %c0_57, %c0_58], %102 {strides = array<i32>} : memref<1x32x1024xf32, #tpu.memory_space<vmem>>, vector<1x32x1024xf32>,
    return
  }
  func.func @transform_0(%arg0: i32) -> (i32, i32, i32, i32, i32) {
    %c0_i32 = arith.constant 0 : i32
    %c0_i32_0 = arith.constant 0 : i32
    %c0_i32_1 = arith.constant 0 : i32
    %c0_i32_2 = arith.constant 0 : i32
    %c0_i32_3 = arith.constant 0 : i32
    return %arg0, %c0_i32, %c0_i32_0, %c0_i32_1, %c0_i32_2 : i32, i32, i32, i32, i32
  }
  func.func @transform_1(%arg0: i32) -> (i32, i32) {
    %c0_i32 = arith.constant 0 : i32
    %c0_i32_0 = arith.constant 0 : i32
    %c0_i32_1 = arith.constant 0 : i32
    return %c0_i32, %c0_i32_0 : i32, i32
  }
  func.func @transform_2(%arg0: i32) -> (i32, i32) {
    %c0_i32 = arith.constant 0 : i32
    %c0_i32_0 = arith.constant 0 : i32
    %c0_i32_1 = arith.constant 0 : i32
    return %c0_i32, %c0_i32_0 : i32, i32
  }
  func.func @transform_3(%arg0: i32) -> (i32, i32) {
    %c0_i32 = arith.constant 0 : i32
    %c0_i32_0 = arith.constant 0 : i32
    %c0_i32_1 = arith.constant 0 : i32
    return %c0_i32, %c0_i32_0 : i32, i32
  }
  func.func @transform_4(%arg0: i32) -> (i32, i32) {
    %c0_i32 = arith.constant 0 : i32
    %c0_i32_0 = arith.constant 0 : i32
    %c0_i32_1 = arith.constant 0 : i32
    return %c0_i32, %c0_i32_0 : i32, i32
  }
  func.func @transform_5(%arg0: i32) -> (i32, i32) {
    %c0_i32 = arith.constant 0 : i32
    %c0_i32_0 = arith.constant 0 : i32
    %c0_i32_1 = arith.constant 0 : i32
    return %c0_i32, %c0_i32_0 : i32, i32
  }
  func.func @transform_6(%arg0: i32) -> (i32, i32) {
    %c0_i32 = arith.constant 0 : i32
    %c0_i32_0 = arith.constant 0 : i32
    %c0_i32_1 = arith.constant 0 : i32
    return %c0_i32, %c0_i32_0 : i32, i32
  }
  func.func @transform_7(%arg0: i32) -> (i32, i32, i32) {
    %c0_i32 = arith.constant 0 : i32
    %c0_i32_0 = arith.constant 0 : i32
    %c0_i32_1 = arith.constant 0 : i32
    return %arg0, %c0_i32, %c0_i32_0 : i32, i32, i32
  }
}

</mosaic_0001>

<llo_original>
// kernel: tpu_custom_call.1
$region0: #{tpu_custom_call.1}
  #allocation0 [shape = 'u32[]', space=smem, size = 0x4, offset = 0x4, fixed_abs, tag = 'smem constant byte address 0x4 - core index']
  #allocation1 [shape = 'u32[144,128]{1,0:T(1,128)}', space=vmem, size = 0x12000, scoped, tag = 'internal scratch']
  #allocation2 [shape = 'f32[1,1]{1,0:T(1,128)S(1)}', space=vmem, size = 0x200, scoped, tag = 'scoped memory for tpu_custom_call.1']
  #allocation3 [shape = 'f32[1,1]{1,0:T(1,128)S(1)}', space=vmem, size = 0x200, scoped, tag = 'scoped memory for tpu_custom_call.1']
  %s0 = inlined_call_operand.vmem [shape: f32[2,4,1,33,33], index: 0, kind: input, shape index: {}]
  %s1 = inlined_call_operand.vmem [shape: f32[9,1], index: 1, kind: input, shape index: {}]
  %s2 = inlined_call_operand.<no memory space> [shape: f32[1,1], index: 2, kind: input, shape index: {}]
  %s3 = inlined_call_operand.<no memory space> [shape: f32[1,1], index: 3, kind: input, shape index: {}]
  %s4 = inlined_call_operand.vmem [shape: bf16[32,1], index: 4, kind: input, shape index: {}]
  %s5 = inlined_call_operand.vmem [shape: f32[32,1], index: 5, kind: input, shape index: {}]
  %s6 = inlined_call_operand.vmem [shape: f32[32,1], index: 6, kind: input, shape index: {}]
  %s7 = inlined_call_operand.hbm [shape: f32[2,32,1024], index: 7, kind: output, shape index: {}]
  %s8 = sld [smem:[#allocation0]]
  $region61: #{tpu_custom_call.1} parent=0
    _
  %s10 = ssub.s32 1, %s8
  %s11 = scalar_select 0, %s10, %s8
  %v12 = vstv %s2
  %13 = vst [vmem:[#allocation2] sm:$0x1] %v12
  %v14 = vstv %s3
  %15 = vst [vmem:[#allocation3] sm:$0x1] %v14
  $region1: #{tpu_custom_call.1} parent=0
    #allocation4 [shape = 'u8[262144]{0}', space=vmem, size = 0x40000, scoped, tag = 'output window, operand 0']
    #allocation5 [shape = 's32[2]{0}', space=sflag, size = 0x8, scoped, tag = 'scoped memory for tpu_custom_call.1']
    %16 = vsyncpa [#allocation5], 0
    %s17 = scalar_lea.sflag [#allocation5], 1
    %18 = vsyncpa %s17, 0
    loop: start=0, step=1, limit=4
    $region2: #{tpu_custom_call.1} parent=1 // loop_pre_header
      _
    $region3: #{tpu_custom_call.1} parent=1 // loop_header
      %s20 = sphi 0, %s24
      %p21 = scmp.ge.s32.totalorder %s20, 4
      %s30 = sphi 0, %s32
      %s33 = sphi 0, %s30
      %s34 = sphi 0, %s33
      %s50 = sphi 0, %s34
      %s54 = sphi 0, %s54
      %s56 = sphi 0, %s54
      %s57 = sphi 0, %s56
      %s71 = sphi 0, %s57
      %s75 = sphi 0, %s75
      %s77 = sphi 0, %s75
      %s78 = sphi 0, %s77
      %s92 = sphi 0, %s78
      %s96 = sphi 0, %s96
      %s98 = sphi 0, %s96
      %s99 = sphi 0, %s98
      %s113 = sphi 0, %s99
      %s117 = sphi 0, %s117
      %s119 = sphi 0, %s117
      %s120 = sphi 0, %s119
      %s134 = sphi 0, %s120
      %s138 = sphi 0, %s138
      %s140 = sphi 0, %s138
      %s141 = sphi 0, %s140
      %s155 = sphi 0, %s141
      %s159 = sphi 0, %s159
      %s161 = sphi 0, %s159
      %s162 = sphi 0, %s161
      %s176 = sphi 0, %s162
      %s182 = sphi 0, %s184
      %s185 = sphi 0, %s182
      %s186 = sphi 0, %s185
      %s202 = sphi 0, %s186
    $region4: #{tpu_custom_call.1} parent=1 // loop_header_branch
      %23 = sbr.rel (%p21) target = $region8
    $region5: #{tpu_custom_call.1} parent=1 // loop_body
      %s25 = ssub.s32 %s20, 1
      %s26 = ssub.s32 %s20, 2
      %s27 = sadd.s32 %s20, 1
      %s28 = ssub.s32 %s20, %s27
      %p29 = scmp.eq.s32.totalorder %s28, 0
      %s31 = sadd.s32 %s30, 1
      %s32 = scalar_select %p29, %s30, %s31
      %p35 = pneg %p29
      %p36 = scmp.eq.s32.totalorder %s20, 1
      %p37 = por %p35, %p36
      %p38 = scmp.ne.s32.totalorder %s30, %s33
      %p39 = scmp.eq.s32.totalorder %s20, 0
      %p40 = por %p38, %p39
      %p41 = scmp.ne.s32.totalorder %s30, %s33
      %p42 = scmp.eq.s32.totalorder %s25, 1
      %p43 = por %p41, %p42
      %p44 = scmp.ne.s32.totalorder %s33, %s34
      %p45 = scmp.eq.s32.totalorder %s25, 0
      %p46 = por %p44, %p45
      %p47 = scmp.ne.s32.totalorder %s33, %s34
      %p48 = scmp.eq.s32.totalorder %s26, 1
      %p49 = por %p47, %p48
      %p51 = scmp.ne.s32.totalorder %s34, %s50
      %p52 = scmp.eq.s32.totalorder %s26, 0
      %p53 = por %p51, %p52
      %s55 = sadd.s32 %s54, 1
      %p58 = scmp.eq.s32.totalorder %s20, 1
      %p59 = scmp.ne.s32.totalorder %s54, %s56
      %p60 = scmp.eq.s32.totalorder %s20, 0
      %p61 = por %p59, %p60
      %p62 = scmp.ne.s32.totalorder %s54, %s56
      %p63 = scmp.eq.s32.totalorder %s25, 1
      %p64 = por %p62, %p63
      %p65 = scmp.ne.s32.totalorder %s56, %s57
      %p66 = scmp.eq.s32.totalorder %s25, 0
      %p67 = por %p65, %p66
      %p68 = scmp.ne.s32.totalorder %s56, %s57
      %p69 = scmp.eq.s32.totalorder %s26, 1
      %p70 = por %p68, %p69
      %p72 = scmp.ne.s32.totalorder %s57, %s71
      %p73 = scmp.eq.s32.totalorder %s26, 0
      %p74 = por %p72, %p73
      %s76 = sadd.s32 %s75, 1
      %p79 = scmp.eq.s32.totalorder %s20, 1
      %p80 = scmp.ne.s32.totalorder %s75, %s77
      %p81 = scmp.eq.s32.totalorder %s20, 0
      %p82 = por %p80, %p81
      %p83 = scmp.ne.s32.totalorder %s75, %s77
      %p84 = scmp.eq.s32.totalorder %s25, 1
      %p85 = por %p83, %p84
      %p86 = scmp.ne.s32.totalorder %s77, %s78
      %p87 = scmp.eq.s32.totalorder %s25, 0
      %p88 = por %p86, %p87
      %p89 = scmp.ne.s32.totalorder %s77, %s78
      %p90 = scmp.eq.s32.totalorder %s26, 1
      %p91 = por %p89, %p90
      %p93 = scmp.ne.s32.totalorder %s78, %s92
      %p94 = scmp.eq.s32.totalorder %s26, 0
      %p95 = por %p93, %p94
      %s97 = sadd.s32 %s96, 1
      %p100 = scmp.eq.s32.totalorder %s20, 1
      %p101 = scmp.ne.s32.totalorder %s96, %s98
      %p102 = scmp.eq.s32.totalorder %s20, 0
      %p103 = por %p101, %p102
      %p104 = scmp.ne.s32.totalorder %s96, %s98
      %p105 = scmp.eq.s32.totalorder %s25, 1
      %p106 = por %p104, %p105
      %p107 = scmp.ne.s32.totalorder %s98, %s99
      %p108 = scmp.eq.s32.totalorder %s25, 0
      %p109 = por %p107, %p108
      %p110 = scmp.ne.s32.totalorder %s98, %s99
      %p111 = scmp.eq.s32.totalorder %s26, 1
      %p112 = por %p110, %p111
      %p114 = scmp.ne.s32.totalorder %s99, %s113
      %p115 = scmp.eq.s32.totalorder %s26, 0
      %p116 = por %p114, %p115
      %s118 = sadd.s32 %s117, 1
      %p121 = scmp.eq.s32.totalorder %s20, 1
      %p122 = scmp.ne.s32.totalorder %s117, %s119
      %p123 = scmp.eq.s32.totalorder %s20, 0
      %p124 = por %p122, %p123
      %p125 = scmp.ne.s32.totalorder %s117, %s119
      %p126 = scmp.eq.s32.totalorder %s25, 1
      %p127 = por %p125, %p126
      %p128 = scmp.ne.s32.totalorder %s119, %s120
      %p129 = scmp.eq.s32.totalorder %s25, 0
      %p130 = por %p128, %p129
      %p131 = scmp.ne.s32.totalorder %s119, %s120
      %p132 = scmp.eq.s32.totalorder %s26, 1
      %p133 = por %p131, %p132
      %p135 = scmp.ne.s32.totalorder %s120, %s134
      %p136 = scmp.eq.s32.totalorder %s26, 0
      %p137 = por %p135, %p136
      %s139 = sadd.s32 %s138, 1
      %p142 = scmp.eq.s32.totalorder %s20, 1
      %p143 = scmp.ne.s32.totalorder %s138, %s140
      %p144 = scmp.eq.s32.totalorder %s20, 0
      %p145 = por %p143, %p144
      %p146 = scmp.ne.s32.totalorder %s138, %s140
      %p147 = scmp.eq.s32.totalorder %s25, 1
      %p148 = por %p146, %p147
      %p149 = scmp.ne.s32.totalorder %s140, %s141
      %p150 = scmp.eq.s32.totalorder %s25, 0
      %p151 = por %p149, %p150
      %p152 = scmp.ne.s32.totalorder %s140, %s141
      %p153 = scmp.eq.s32.totalorder %s26, 1
      %p154 = por %p152, %p153
      %p156 = scmp.ne.s32.totalorder %s141, %s155
      %p157 = scmp.eq.s32.totalorder %s26, 0
      %p158 = por %p156, %p157
      %s160 = sadd.s32 %s159, 1
      %p163 = scmp.eq.s32.totalorder %s20, 1
      %p164 = scmp.ne.s32.totalorder %s159, %s161
      %p165 = scmp.eq.s32.totalorder %s20, 0
      %p166 = por %p164, %p165
      %p167 = scmp.ne.s32.totalorder %s159, %s161
      %p168 = scmp.eq.s32.totalorder %s25, 1
      %p169 = por %p167, %p168
      %p170 = scmp.ne.s32.totalorder %s161, %s162
      %p171 = scmp.eq.s32.totalorder %s25, 0
      %p172 = por %p170, %p171
      %p173 = scmp.ne.s32.totalorder %s161, %s162
      %p174 = scmp.eq.s32.totalorder %s26, 1
      %p175 = por %p173, %p174
      %p177 = scmp.ne.s32.totalorder %s162, %s176
      %p178 = scmp.eq.s32.totalorder %s26, 0
      %p179 = por %p177, %p178
      %s180 = ssub.s32 %s20, %s27
      %p181 = scmp.eq.s32.totalorder %s180, 0
      %s183 = sadd.s32 %s182, 1
      %s184 = scalar_select %p181, %s182, %s183
      %p187 = pneg %p181
      %p188 = scmp.eq.s32.totalorder %s20, 1
      %p189 = por %p187, %p188
      %p190 = scmp.ne.s32.totalorder %s182, %s185
      %p191 = scmp.eq.s32.totalorder %s20, 0
      %p192 = por %p190, %p191
      %p193 = scmp.ne.s32.totalorder %s182, %s185
      %p194 = scmp.eq.s32.totalorder %s25, 1
      %p195 = por %p193, %p194
      %p196 = scmp.ne.s32.totalorder %s185, %s186
      %p197 = scmp.eq.s32.totalorder %s25, 0
      %p198 = por %p196, %p197
      %p199 = scmp.ne.s32.totalorder %s185, %s186
      %p200 = scmp.eq.s32.totalorder %s26, 1
      %p201 = por %p199, %p200
      %p203 = scmp.ne.s32.totalorder %s186, %s202
      %p204 = scmp.eq.s32.totalorder %s26, 0
      %p205 = por %p203, %p204
      %p206 = scmp.le.s32.totalorder 1, %s20
      %p207 = scmp.lt.s32.totalorder %s20, 3
      %p208 = pnand %p206, %p207
      %p209 = pneg %p208
      // Predicated region
      $region9: #{tpu_custom_call.1} parent=5 // pred_check
        _
      $region10: #{tpu_custom_call.1} parent=5 // pred_check_branch
        %211 = sbr.rel (%p208) target = $region12
      $region11: #{tpu_custom_call.1} parent=5 // pred_region
        %s212 = ssub.s32 %s20, 1
        // Predicated region
        $region13: #{tpu_custom_call.1} parent=11 // pred_check
          %p213 = pneg %p67
        $region14: #{tpu_custom_call.1} parent=11 // pred_check_branch
          %215 = sbr.rel (%p213) target = $region16
        $region15: #{tpu_custom_call.1} parent=11 // pred_region
          _
        $region16: #{tpu_custom_call.1} parent=11 // pred_fallthru
          _
        // Predicated region
        $region17: #{tpu_custom_call.1} parent=11 // pred_check
          %p216 = pneg %p88
        $region18: #{tpu_custom_call.1} parent=11 // pred_check_branch
          %218 = sbr.rel (%p216) target = $region20
        $region19: #{tpu_custom_call.1} parent=11 // pred_region
          _
        $region20: #{tpu_custom_call.1} parent=11 // pred_fallthru
          _
        // Predicated region
        $region21: #{tpu_custom_call.1} parent=11 // pred_check
          %p219 = pneg %p109
        $region22: #{tpu_custom_call.1} parent=11 // pred_check_branch
          %221 = sbr.rel (%p219) target = $region24
        $region23: #{tpu_custom_call.1} parent=11 // pred_region
          _
        $region24: #{tpu_custom_call.1} parent=11 // pred_fallthru
          _
        // Predicated region
        $region25: #{tpu_custom_call.1} parent=11 // pred_check
          %p222 = pneg %p130
        $region26: #{tpu_custom_call.1} parent=11 // pred_check_branch
          %224 = sbr.rel (%p222) target = $region28
        $region27: #{tpu_custom_call.1} parent=11 // pred_region
          _
        $region28: #{tpu_custom_call.1} parent=11 // pred_fallthru
          _
        // Predicated region
        $region29: #{tpu_custom_call.1} parent=11 // pred_check
          %p225 = pneg %p151
        $region30: #{tpu_custom_call.1} parent=11 // pred_check_branch
          %227 = sbr.rel (%p225) target = $region32
        $region31: #{tpu_custom_call.1} parent=11 // pred_region
          _
        $region32: #{tpu_custom_call.1} parent=11 // pred_fallthru
          _
        // Predicated region
        $region33: #{tpu_custom_call.1} parent=11 // pred_check
          %p228 = pneg %p172
        $region34: #{tpu_custom_call.1} parent=11 // pred_check_branch
          %230 = sbr.rel (%p228) target = $region36
        $region35: #{tpu_custom_call.1} parent=11 // pred_region
          _
        $region36: #{tpu_custom_call.1} parent=11 // pred_fallthru
          _
      $region12: #{tpu_custom_call.1} parent=5 // pred_fallthru
        _
      %p231 = scmp.lt.s32.totalorder %s20, 2
      // Predicated region
      $region37: #{tpu_custom_call.1} parent=5 // pred_check
        %p232 = pneg %p231
      $region38: #{tpu_custom_call.1} parent=5 // pred_check_branch
        %234 = sbr.rel (%p232) target = $region40
      $region39: #{tpu_custom_call.1} parent=5 // pred_region
        // Predicated region
        $region41: #{tpu_custom_call.1} parent=39 // pred_check
          %p235 = pneg %p40
        $region42: #{tpu_custom_call.1} parent=39 // pred_check_branch
          %237 = sbr.rel (%p235) target = $region44
        $region43: #{tpu_custom_call.1} parent=39 // pred_region
          %p238 = scmp.lt.s32.totalorder %s20, 1
          %s239 = scalar_select %p238, %s20, 1
          %s240 = smul.addr %s239, 20
          %s241 = smul.addr %s240, 8
          %s242 = scalar_lea.vmem %s0, %s241
        $region44: #{tpu_custom_call.1} parent=39 // pred_fallthru
          _
      $region40: #{tpu_custom_call.1} parent=5 // pred_fallthru
        _
      %p243 = scmp.le.s32.totalorder 1, %s20
      %p244 = scmp.lt.s32.totalorder %s20, 3
      %p245 = pnand %p243, %p244
      %p246 = pneg %p245
      // Predicated region
      $region45: #{tpu_custom_call.1} parent=5 // pred_check
        _
      $region46: #{tpu_custom_call.1} parent=5 // pred_check_branch
        %248 = sbr.rel (%p245) target = $region48
      $region47: #{tpu_custom_call.1} parent=5 // pred_region
        %s249 = ssub.s32 %s20, 1
        %p250 = scmp.lt.s32.totalorder %s25, 1
        %s251 = scalar_select %p250, %s25, 1
        %s252 = smul.addr %s251, 20
        %s253 = smul.addr %s252, 8
        %s254 = scalar_lea.vmem %s0, %s253
        %p255 = pneg %p46
        %p256 = pneg %p43
        %p257 = pneg %p67
        %p258 = pneg %p64
        %p259 = pneg %p88
        %p260 = pneg %p85
        %p261 = pneg %p109
        %p262 = pneg %p106
        %p263 = pneg %p130
        %p264 = pneg %p127
        %p265 = pneg %p151
        %p266 = pneg %p148
        %p267 = pneg %p172
        %p268 = pneg %p169
        %p269 = pneg %p198
        %p270 = pneg %p195
        %s271 = sand.u32 %s185, 1
        %s272 = scalar_lea.sflag [#allocation5], %s271
        %s273 = sand.u32 %s185, 1
        %s274 = smul.addr %s273, 256
        %s275 = scalar_lea.vmem [#allocation4], %s274
        %p276 = scmp.lt.s32.totalorder %s25, 1
        %s277 = scalar_select %p276, %s25, 1
        %s278 = smul.addr %s277, 20
        %s279 = smul.addr %s278, 8
        %s280 = scalar_lea.vmem %s0, %s279
        %v281 = vld [vmem:[%s1] sm:$0xff]
        %v282 = vld [vmem:[%s1 + $0x8] sm:$0x1]
        %v283 = vld [vmem:[%s280] sm:$0xff]
        %v284 = vld [vmem:[%s280 + $0x8] sm:$0xff]
        %v285 = vld [vmem:[%s280 + $0x10] sm:$0xff]
        %v286 = vld [vmem:[%s280 + $0x18] sm:$0xff]
        %s288 = vtos %v281
        %v289 = vstv %s288
        %v291 = vmul.f32 %v283, %v289
        %v292 = vmul.f32 %v284, %v289
        %v293 = vmul.f32 %v285, %v289
        %v294 = vmul.f32 %v286, %v289
        %s295 = scalar_lea.vmem %s280, 40
        %v296 = vld [vmem:[%s295] sm:$0xff]
        %v297 = vld [vmem:[%s295 + $0x8] sm:$0xff]
        %v298 = vld [vmem:[%s295 + $0x10] sm:$0xff]
        %v299 = vld [vmem:[%s295 + $0x18] sm:$0xff]
        %v300 = vrot.slane %v281, 1
        %s301 = vtos %v300
        %v302 = vstv %s301
        %v304 = vmul.f32 %v296, %v302
        %v305 = vmul.f32 %v297, %v302
        %v306 = vmul.f32 %v298, %v302
        %v307 = vmul.f32 %v299, %v302
        %v308 = vadd.f32 %v291, %v304
        %v309 = vadd.f32 %v292, %v305
        %v310 = vadd.f32 %v293, %v306
        %v311 = vadd.f32 %v294, %v307
        %v312 = vrot.slane %v281, 2
        %s313 = vtos %v312
        %v314 = vstv %s313
        %v316 = vmul.f32 %v283, %v314
        %v317 = vmul.f32 %v284, %v314
        %v318 = vmul.f32 %v285, %v314
        %v319 = vmul.f32 %v286, %v314
        %324 = vrot.lane.b32.xlu0 %v316, 127
        %v325 = vpop.permute.xlu0 %324
        %326 = vrot.lane.b32.xlu0 %v317, 127
        %v327 = vpop.permute.xlu0 %326
        %328 = vrot.lane.b32.xlu0 %v318, 127
        %v329 = vpop.permute.xlu0 %328
        %330 = vrot.lane.b32.xlu0 %v319, 127
        %v331 = vpop.permute.xlu0 %330
        %v336 = vadd.f32 %v308, %v325
        %v337 = vadd.f32 %v309, %v327
        %v338 = vadd.f32 %v310, %v329
        %v339 = vadd.f32 %v311, %v331
        %s340 = scalar_lea.vmem %s280, 80
        %v341 = vld [vmem:[%s340] sm:$0xff]
        %v342 = vld [vmem:[%s340 + $0x8] sm:$0xff]
        %v343 = vld [vmem:[%s340 + $0x10] sm:$0xff]
        %v344 = vld [vmem:[%s340 + $0x18] sm:$0xff]
        %v345 = vrot.slane %v281, 3
        %s346 = vtos %v345
        %v347 = vstv %s346
        %v349 = vmul.f32 %v341, %v347
        %v350 = vmul.f32 %v342, %v347
        %v351 = vmul.f32 %v343, %v347
        %v352 = vmul.f32 %v344, %v347
        %s353 = scalar_lea.vmem %s280, 120
        %v354 = vld [vmem:[%s353] sm:$0xff]
        %v355 = vld [vmem:[%s353 + $0x8] sm:$0xff]
        %v356 = vld [vmem:[%s353 + $0x10] sm:$0xff]
        %v357 = vld [vmem:[%s353 + $0x18] sm:$0xff]
        %v358 = vrot.slane %v281, 4
        %s359 = vtos %v358
        %v360 = vstv %s359
        %v362 = vmul.f32 %v354, %v360
        %v363 = vmul.f32 %v355, %v360
        %v364 = vmul.f32 %v356, %v360
        %v365 = vmul.f32 %v357, %v360
        %v366 = vadd.f32 %v349, %v362
        %v367 = vadd.f32 %v350, %v363
        %v368 = vadd.f32 %v351, %v364
        %v369 = vadd.f32 %v352, %v365
        %v370 = vrot.slane %v281, 5
        %s371 = vtos %v370
        %v372 = vstv %s371
        %v374 = vmul.f32 %v341, %v372
        %v375 = vmul.f32 %v342, %v372
        %v376 = vmul.f32 %v343, %v372
        %v377 = vmul.f32 %v344, %v372
        %382 = vrot.lane.b32.xlu0 %v374, 127
        %v383 = vpop.permute.xlu0 %382
        %384 = vrot.lane.b32.xlu0 %v375, 127
        %v385 = vpop.permute.xlu0 %384
        %386 = vrot.lane.b32.xlu0 %v376, 127
        %v387 = vpop.permute.xlu0 %386
        %388 = vrot.lane.b32.xlu0 %v377, 127
        %v389 = vpop.permute.xlu0 %388
        %v394 = vadd.f32 %v366, %v383
        %v395 = vadd.f32 %v367, %v385
        %v396 = vadd.f32 %v368, %v387
        %v397 = vadd.f32 %v369, %v389
        %v398 = vld [vmem:[%s280 + $0x1] sm:$0xff]
        %v399 = vld [vmem:[%s280 + $0x9] sm:$0xff]
        %v400 = vld [vmem:[%s280 + $0x11] sm:$0xff]
        %v401 = vld [vmem:[%s280 + $0x19] sm:$0xff]
        %v402 = vrot.slane %v281, 6
        %s403 = vtos %v402
        %v404 = vstv %s403
        %v406 = vmul.f32 %v398, %v404
        %v407 = vmul.f32 %v399, %v404
        %v408 = vmul.f32 %v400, %v404
        %v409 = vmul.f32 %v401, %v404
        %v410 = vld [vmem:[%s295 + $0x1] sm:$0xff]
        %v411 = vld [vmem:[%s295 + $0x9] sm:$0xff]
        %v412 = vld [vmem:[%s295 + $0x11] sm:$0xff]
        %v413 = vld [vmem:[%s295 + $0x19] sm:$0xff]
        %v414 = vrot.slane %v281, 7
        %s415 = vtos %v414
        %v416 = vstv %s415
        %v418 = vmul.f32 %v410, %v416
        %v419 = vmul.f32 %v411, %v416
        %v420 = vmul.f32 %v412, %v416
        %v421 = vmul.f32 %v413, %v416
        %v422 = vadd.f32 %v406, %v418
        %v423 = vadd.f32 %v407, %v419
        %v424 = vadd.f32 %v408, %v420
        %v425 = vadd.f32 %v409, %v421
        %s427 = vtos %v282
        %v428 = vstv %s427
        %v430 = vmul.f32 %v398, %v428
        %v431 = vmul.f32 %v399, %v428
        %v432 = vmul.f32 %v400, %v428
        %v433 = vmul.f32 %v401, %v428
        %438 = vrot.lane.b32.xlu0 %v430, 127
        %v439 = vpop.permute.xlu0 %438
        %440 = vrot.lane.b32.xlu0 %v431, 127
        %v441 = vpop.permute.xlu0 %440
        %442 = vrot.lane.b32.xlu0 %v432, 127
        %v443 = vpop.permute.xlu0 %442
        %444 = vrot.lane.b32.xlu0 %v433, 127
        %v445 = vpop.permute.xlu0 %444
        %v450 = vadd.f32 %v422, %v439
        %v451 = vadd.f32 %v423, %v441
        %v452 = vadd.f32 %v424, %v443
        %v453 = vadd.f32 %v425, %v445
        %v454 = vadd.f32 %v336, %v394
        %v455 = vadd.f32 %v337, %v395
        %v456 = vadd.f32 %v338, %v396
        %v457 = vadd.f32 %v339, %v397
        %v458 = vadd.f32 %v454, %v450
        %v459 = vadd.f32 %v455, %v451
        %v460 = vadd.f32 %v456, %v452
        %v461 = vadd.f32 %v457, %v453
        %v462 = vcombine.high %v458, 0.0
        %v464 = vunpack.c.l.s4 1983009808
        %v465 = vunpack.c.0.s8 %v464
        %v466 = vlaneseq
        %v467 = vshrl.u32 %v466, 7
        %v468 = vsub.s32 %v465, %v467
        %v469 = vrot.slane %v458, %v468
        %v471 = vunpack.c.l.s4 1983009808
        %v472 = vunpack.c.0.s8 %v471
        %v473 = vlaneseq
        %v474 = vshrl.u32 %v473, 7
        %v475 = vsub.s32 %v472, %v474
        %v476 = vrot.slane %v462, %v475
        %v477 = vcombine.high %v469, 0.0
        %v479 = vunpack.c.l.s4 1934713408
        %v480 = vunpack.c.0.s8 %v479
        %v481 = vlaneseq
        %v482 = vshrl.u32 %v481, 7
        %v483 = vsub.s32 %v480, %v482
        %v484 = vrot.slane %v469, %v483
        %v486 = vunpack.c.l.s4 1934713408
        %v487 = vunpack.c.0.s8 %v486
        %v488 = vlaneseq
        %v489 = vshrl.u32 %v488, 7
        %v490 = vsub.s32 %v487, %v489
        %v491 = vrot.slane %v477, %v490
        %v492 = vcombine.high %v476, 0.0
        %v494 = vunpack.c.l.s4 1934713408
        %v495 = vunpack.c.0.s8 %v494
        %v496 = vlaneseq
        %v497 = vshrl.u32 %v496, 7
        %v498 = vsub.s32 %v495, %v497
        %v499 = vrot.slane %v476, %v498
        %v501 = vunpack.c.l.s4 1934713408
        %v502 = vunpack.c.0.s8 %v501
        %v503 = vlaneseq
        %v504 = vshrl.u32 %v503, 7
        %v505 = vsub.s32 %v502, %v504
        %v506 = vrot.slane %v492, %v505
        %v507 = vcombine.high %v484, 0.0
        %v508 = vcombine.high %v491, 0.0
        %v509 = vcombine.high %v499, 0.0
        %v510 = vcombine.high %v506, 0.0
        %v511 = vcombine.high %v459, 0.0
        %v513 = vunpack.c.l.s4 1983009808
        %v514 = vunpack.c.0.s8 %v513
        %v515 = vlaneseq
        %v516 = vshrl.u32 %v515, 7
        %v517 = vsub.s32 %v514, %v516
        %v518 = vrot.slane %v459, %v517
        %v520 = vunpack.c.l.s4 1983009808
        %v521 = vunpack.c.0.s8 %v520
        %v522 = vlaneseq
        %v523 = vshrl.u32 %v522, 7
        %v524 = vsub.s32 %v521, %v523
        %v525 = vrot.slane %v511, %v524
        %v526 = vcombine.high %v518, 0.0
        %v528 = vunpack.c.l.s4 1934713408
        %v529 = vunpack.c.0.s8 %v528
        %v530 = vlaneseq
        %v531 = vshrl.u32 %v530, 7
        %v532 = vsub.s32 %v529, %v531
        %v533 = vrot.slane %v518, %v532
        %v535 = vunpack.c.l.s4 1934713408
        %v536 = vunpack.c.0.s8 %v535
        %v537 = vlaneseq
        %v538 = vshrl.u32 %v537, 7
        %v539 = vsub.s32 %v536, %v538
        %v540 = vrot.slane %v526, %v539
        %v541 = vcombine.high %v525, 0.0
        %v543 = vunpack.c.l.s4 1934713408
        %v544 = vunpack.c.0.s8 %v543
        %v545 = vlaneseq
        %v546 = vshrl.u32 %v545, 7
        %v547 = vsub.s32 %v544, %v546
        %v548 = vrot.slane %v525, %v547
        %v550 = vunpack.c.l.s4 1934713408
        %v551 = vunpack.c.0.s8 %v550
        %v552 = vlaneseq
        %v553 = vshrl.u32 %v552, 7
        %v554 = vsub.s32 %v551, %v553
        %v555 = vrot.slane %v541, %v554
        %v556 = vcombine.high %v533, 0.0
        %v557 = vcombine.high %v540, 0.0
        %v558 = vcombine.high %v548, 0.0
        %v559 = vcombine.high %v555, 0.0
        %v560 = vcombine.high %v460, 0.0
        %v562 = vunpack.c.l.s4 1983009808
        %v563 = vunpack.c.0.s8 %v562
        %v564 = vlaneseq
        %v565 = vshrl.u32 %v564, 7
        %v566 = vsub.s32 %v563, %v565
        %v567 = vrot.slane %v460, %v566
        %v569 = vunpack.c.l.s4 1983009808
        %v570 = vunpack.c.0.s8 %v569
        %v571 = vlaneseq
        %v572 = vshrl.u32 %v571, 7
        %v573 = vsub.s32 %v570, %v572
        %v574 = vrot.slane %v560, %v573
        %v575 = vcombine.high %v567, 0.0
        %v577 = vunpack.c.l.s4 1934713408
        %v578 = vunpack.c.0.s8 %v577
        %v579 = vlaneseq
        %v580 = vshrl.u32 %v579, 7
        %v581 = vsub.s32 %v578, %v580
        %v582 = vrot.slane %v567, %v581
        %v584 = vunpack.c.l.s4 1934713408
        %v585 = vunpack.c.0.s8 %v584
        %v586 = vlaneseq
        %v587 = vshrl.u32 %v586, 7
        %v588 = vsub.s32 %v585, %v587
        %v589 = vrot.slane %v575, %v588
        %v590 = vcombine.high %v574, 0.0
        %v592 = vunpack.c.l.s4 1934713408
        %v593 = vunpack.c.0.s8 %v592
        %v594 = vlaneseq
        %v595 = vshrl.u32 %v594, 7
        %v596 = vsub.s32 %v593, %v595
        %v597 = vrot.slane %v574, %v596
        %v599 = vunpack.c.l.s4 1934713408
        %v600 = vunpack.c.0.s8 %v599
        %v601 = vlaneseq
        %v602 = vshrl.u32 %v601, 7
        %v603 = vsub.s32 %v600, %v602
        %v604 = vrot.slane %v590, %v603
        %v605 = vcombine.high %v582, 0.0
        %v606 = vcombine.high %v589, 0.0
        %v607 = vcombine.high %v597, 0.0
        %v608 = vcombine.high %v604, 0.0
        %v609 = vcombine.high %v461, 0.0
        %v611 = vunpack.c.l.s4 1983009808
        %v612 = vunpack.c.0.s8 %v611
        %v613 = vlaneseq
        %v614 = vshrl.u32 %v613, 7
        %v615 = vsub.s32 %v612, %v614
        %v616 = vrot.slane %v461, %v615
        %v618 = vunpack.c.l.s4 1983009808
        %v619 = vunpack.c.0.s8 %v618
        %v620 = vlaneseq
        %v621 = vshrl.u32 %v620, 7
        %v622 = vsub.s32 %v619, %v621
        %v623 = vrot.slane %v609, %v622
        %v624 = vcombine.high %v616, 0.0
        %v626 = vunpack.c.l.s4 1934713408
        %v627 = vunpack.c.0.s8 %v626
        %v628 = vlaneseq
        %v629 = vshrl.u32 %v628, 7
        %v630 = vsub.s32 %v627, %v629
        %v631 = vrot.slane %v616, %v630
        %v633 = vunpack.c.l.s4 1934713408
        %v634 = vunpack.c.0.s8 %v633
        %v635 = vlaneseq
        %v636 = vshrl.u32 %v635, 7
        %v637 = vsub.s32 %v634, %v636
        %v638 = vrot.slane %v624, %v637
        %v639 = vcombine.high %v623, 0.0
        %v641 = vunpack.c.l.s4 1934713408
        %v642 = vunpack.c.0.s8 %v641
        %v643 = vlaneseq
        %v644 = vshrl.u32 %v643, 7
        %v645 = vsub.s32 %v642, %v644
        %v646 = vrot.slane %v623, %v645
        %v648 = vunpack.c.l.s4 1934713408
        %v649 = vunpack.c.0.s8 %v648
        %v650 = vlaneseq
        %v651 = vshrl.u32 %v650, 7
        %v652 = vsub.s32 %v649, %v651
        %v653 = vrot.slane %v639, %v652
        %v654 = vcombine.high %v631, 0.0
        %v655 = vcombine.high %v638, 0.0
        %v656 = vcombine.high %v646, 0.0
        %v657 = vcombine.high %v653, 0.0
        %659 = vrot.lane.b32.xlu0 %v507, 32
        %v660 = vpop.permute.xlu0 %659
        %663 = vrot.lane.b32.xlu0 %v491, 64
        %v664 = vpop.permute.xlu0 %663
        %667 = vrot.lane.b32.xlu0 %v508, 96
        %v668 = vpop.permute.xlu0 %667
        %671 = vrot.lane.b32.xlu0 %v509, 32
        %v672 = vpop.permute.xlu0 %671
        %675 = vrot.lane.b32.xlu0 %v506, 64
        %v676 = vpop.permute.xlu0 %675
        %679 = vrot.lane.b32.xlu0 %v510, 96
        %v680 = vpop.permute.xlu0 %679
        %683 = vrot.lane.b32.xlu0 %v556, 32
        %v684 = vpop.permute.xlu0 %683
        %687 = vrot.lane.b32.xlu0 %v540, 64
        %v688 = vpop.permute.xlu0 %687
        %691 = vrot.lane.b32.xlu0 %v557, 96
        %v692 = vpop.permute.xlu0 %691
        %695 = vrot.lane.b32.xlu0 %v558, 32
        %v696 = vpop.permute.xlu0 %695
        %699 = vrot.lane.b32.xlu0 %v555, 64
        %v700 = vpop.permute.xlu0 %699
        %703 = vrot.lane.b32.xlu0 %v559, 96
        %v704 = vpop.permute.xlu0 %703
        %707 = vrot.lane.b32.xlu0 %v605, 32
        %v708 = vpop.permute.xlu0 %707
        %711 = vrot.lane.b32.xlu0 %v589, 64
        %v712 = vpop.permute.xlu0 %711
        %715 = vrot.lane.b32.xlu0 %v606, 96
        %v716 = vpop.permute.xlu0 %715
        %719 = vrot.lane.b32.xlu0 %v607, 32
        %v720 = vpop.permute.xlu0 %719
        %723 = vrot.lane.b32.xlu0 %v604, 64
        %v724 = vpop.permute.xlu0 %723
        %727 = vrot.lane.b32.xlu0 %v608, 96
        %v728 = vpop.permute.xlu0 %727
        %731 = vrot.lane.b32.xlu0 %v654, 32
        %v732 = vpop.permute.xlu0 %731
        %735 = vrot.lane.b32.xlu0 %v638, 64
        %v736 = vpop.permute.xlu0 %735
        %739 = vrot.lane.b32.xlu0 %v655, 96
        %v740 = vpop.permute.xlu0 %739
        %743 = vrot.lane.b32.xlu0 %v656, 32
        %v744 = vpop.permute.xlu0 %743
        %747 = vrot.lane.b32.xlu0 %v653, 64
        %v748 = vpop.permute.xlu0 %747
        %751 = vrot.lane.b32.xlu0 %v657, 96
        %v752 = vpop.permute.xlu0 %751
        %vm754 = vcmask 261120
        %v755 = vsel %vm754, %v484, %v660
        %vm756 = vcmask 523264
        %v757 = vsel %vm756, %v755, %v664
        %vm758 = vcmask 785408
        %v759 = vsel %vm758, %v757, %v668
        %v760 = vsel %vm754, %v499, %v672
        %v761 = vsel %vm756, %v760, %v676
        %v762 = vsel %vm758, %v761, %v680
        %v763 = vsel %vm754, %v533, %v684
        %v764 = vsel %vm756, %v763, %v688
        %v765 = vsel %vm758, %v764, %v692
        %v766 = vsel %vm754, %v548, %v696
        %v767 = vsel %vm756, %v766, %v700
        %v768 = vsel %vm758, %v767, %v704
        %v769 = vsel %vm754, %v582, %v708
        %v770 = vsel %vm756, %v769, %v712
        %v771 = vsel %vm758, %v770, %v716
        %v772 = vsel %vm754, %v597, %v720
        %v773 = vsel %vm756, %v772, %v724
        %v774 = vsel %vm758, %v773, %v728
        %v775 = vsel %vm754, %v631, %v732
        %v776 = vsel %vm756, %v775, %v736
        %v777 = vsel %vm758, %v776, %v740
        %v778 = vsel %vm754, %v646, %v744
        %v779 = vsel %vm756, %v778, %v748
        %v780 = vsel %vm758, %v779, %v752
        %v781 = vld [vmem:[#allocation2] sm:$0x1]
        %783 = vset.pattern.permute.xlu0 0
        %784 = vperm.xlu0 %783, %v781
        %v785 = vpop.permute.xlu0 %784
        %v787 = vlaneseq
        %v788 = vshrl.u32 %v787, 7
        %v789 = vsub.s32 0, %v788
        %v790 = vrot.slane %v785, %v789
        %v791 = vmul.f32 %v759, %v790
        %v792 = vmul.f32 %v762, %v790
        %v793 = vmul.f32 %v765, %v790
        %v794 = vmul.f32 %v768, %v790
        %v795 = vmul.f32 %v771, %v790
        %v796 = vmul.f32 %v774, %v790
        %v797 = vmul.f32 %v777, %v790
        %v798 = vmul.f32 %v780, %v790
        %v799 = vld [vmem:[#allocation3] sm:$0x1]
        %801 = vset.pattern.permute.xlu0 0
        %802 = vperm.xlu0 %801, %v799
        %v803 = vpop.permute.xlu0 %802
        %v805 = vlaneseq
        %v806 = vshrl.u32 %v805, 7
        %v807 = vsub.s32 0, %v806
        %v808 = vrot.slane %v803, %v807
        %v809 = vadd.f32 %v791, %v808
        %v810 = vadd.f32 %v792, %v808
        %v811 = vadd.f32 %v793, %v808
        %v812 = vadd.f32 %v794, %v808
        %v813 = vadd.f32 %v795, %v808
        %v814 = vadd.f32 %v796, %v808
        %v815 = vadd.f32 %v797, %v808
        %v816 = vadd.f32 %v798, %v808
        %v817 = vmax.f32 %v809, 0.0
        %v818 = vmax.f32 %v810, 0.0
        %v819 = vmax.f32 %v811, 0.0
        %v820 = vmax.f32 %v812, 0.0
        %v821 = vmax.f32 %v813, 0.0
        %v822 = vmax.f32 %v814, 0.0
        %v823 = vmax.f32 %v815, 0.0
        %v824 = vmax.f32 %v816, 0.0
        %v825 = vmin.f32 %v817, 6.0
        %v826 = vmin.f32 %v818, 6.0
        %v827 = vmin.f32 %v819, 6.0
        %v828 = vmin.f32 %v820, 6.0
        %v829 = vmin.f32 %v821, 6.0
        %v830 = vmin.f32 %v822, 6.0
        %v831 = vmin.f32 %v823, 6.0
        %v832 = vmin.f32 %v824, 6.0
        %v833 = vpack.c.bf16 %v825, %v825
        %v834 = vpack.c.bf16 %v826, %v826
        %v835 = vpack.c.bf16 %v827, %v827
        %v836 = vpack.c.bf16 %v828, %v828
        %v837 = vpack.c.bf16 %v829, %v829
        %v838 = vpack.c.bf16 %v830, %v830
        %v839 = vpack.c.bf16 %v831, %v831
        %v840 = vpack.c.bf16 %v832, %v832
        %v841 = vld [vmem:[%s4] sm:$0xf]
        %v842 = vld [vmem:[%s4 + $0x4] sm:$0xf]
        %v843 = vld [vmem:[%s4 + $0x8] sm:$0xf]
        %v844 = vld [vmem:[%s4 + $0xc] sm:$0xf]
        %v845 = vunpack.c.l.bf16 %v841
        %v846 = vunpack.c.l.bf16 %v842
        %v847 = vunpack.c.l.bf16 %v843
        %v848 = vunpack.c.l.bf16 %v844
        %v849 = vunpack.c.l.bf16 %v833
        %v850 = vunpack.c.l.bf16 %v834
        %v851 = vunpack.c.l.bf16 %v835
        %v852 = vunpack.c.l.bf16 %v836
        %v853 = vunpack.c.l.bf16 %v837
        %v854 = vunpack.c.l.bf16 %v838
        %v855 = vunpack.c.l.bf16 %v839
        %v856 = vunpack.c.l.bf16 %v840
        %858 = vset.pattern.permute.xlu0 0
        %859 = vperm.xlu0 %858, %v845
        %v860 = vpop.permute.xlu0 %859
        %863 = vset.pattern.permute.xlu0 0
        %864 = vperm.xlu0 %863, %v846
        %v865 = vpop.permute.xlu0 %864
        %868 = vset.pattern.permute.xlu0 0
        %869 = vperm.xlu0 %868, %v847
        %v870 = vpop.permute.xlu0 %869
        %873 = vset.pattern.permute.xlu0 0
        %874 = vperm.xlu0 %873, %v848
        %v875 = vpop.permute.xlu0 %874
        %v877 = vlaneseq
        %v878 = vshrl.u32 %v877, 7
        %v879 = vsub.s32 0, %v878
        %v880 = vrot.slane %v849, %v879
        %v881 = vlaneseq
        %v882 = vshrl.u32 %v881, 7
        %v883 = vsub.s32 0, %v882
        %v884 = vrot.slane %v850, %v883
        %v885 = vlaneseq
        %v886 = vshrl.u32 %v885, 7
        %v887 = vsub.s32 0, %v886
        %v888 = vrot.slane %v851, %v887
        %v889 = vlaneseq
        %v890 = vshrl.u32 %v889, 7
        %v891 = vsub.s32 0, %v890
        %v892 = vrot.slane %v852, %v891
        %v893 = vlaneseq
        %v894 = vshrl.u32 %v893, 7
        %v895 = vsub.s32 0, %v894
        %v896 = vrot.slane %v853, %v895
        %v897 = vlaneseq
        %v898 = vshrl.u32 %v897, 7
        %v899 = vsub.s32 0, %v898
        %v900 = vrot.slane %v854, %v899
        %v901 = vlaneseq
        %v902 = vshrl.u32 %v901, 7
        %v903 = vsub.s32 0, %v902
        %v904 = vrot.slane %v855, %v903
        %v905 = vlaneseq
        %v906 = vshrl.u32 %v905, 7
        %v907 = vsub.s32 0, %v906
        %v908 = vrot.slane %v856, %v907
        %v909 = vmul.f32 %v860, %v880
        %v910 = vmul.f32 %v860, %v884
        %v911 = vmul.f32 %v860, %v888
        %v912 = vmul.f32 %v860, %v892
        %v913 = vmul.f32 %v860, %v896
        %v914 = vmul.f32 %v860, %v900
        %v915 = vmul.f32 %v860, %v904
        %v916 = vmul.f32 %v860, %v908
        %v917 = vmul.f32 %v865, %v880
        %v918 = vmul.f32 %v865, %v884
        %v919 = vmul.f32 %v865, %v888
        %v920 = vmul.f32 %v865, %v892
        %v921 = vmul.f32 %v865, %v896
        %v922 = vmul.f32 %v865, %v900
        %v923 = vmul.f32 %v865, %v904
        %v924 = vmul.f32 %v865, %v908
        %v925 = vmul.f32 %v870, %v880
        %v926 = vmul.f32 %v870, %v884
        %v927 = vmul.f32 %v870, %v888
        %v928 = vmul.f32 %v870, %v892
        %v929 = vmul.f32 %v870, %v896
        %v930 = vmul.f32 %v870, %v900
        %v931 = vmul.f32 %v870, %v904
        %v932 = vmul.f32 %v870, %v908
        %v933 = vmul.f32 %v875, %v880
        %v934 = vmul.f32 %v875, %v884
        %v935 = vmul.f32 %v875, %v888
        %v936 = vmul.f32 %v875, %v892
        %v937 = vmul.f32 %v875, %v896
        %v938 = vmul.f32 %v875, %v900
        %v939 = vmul.f32 %v875, %v904
        %v940 = vmul.f32 %v875, %v908
        %v941 = vld [vmem:[%s5] sm:$0xff]
        %v942 = vld [vmem:[%s5 + $0x8] sm:$0xff]
        %v943 = vld [vmem:[%s5 + $0x10] sm:$0xff]
        %v944 = vld [vmem:[%s5 + $0x18] sm:$0xff]
        %946 = vset.pattern.permute.xlu0 0
        %947 = vperm.xlu0 %946, %v941
        %v948 = vpop.permute.xlu0 %947
        %951 = vset.pattern.permute.xlu0 0
        %952 = vperm.xlu0 %951, %v942
        %v953 = vpop.permute.xlu0 %952
        %956 = vset.pattern.permute.xlu0 0
        %957 = vperm.xlu0 %956, %v943
        %v958 = vpop.permute.xlu0 %957
        %961 = vset.pattern.permute.xlu0 0
        %962 = vperm.xlu0 %961, %v944
        %v963 = vpop.permute.xlu0 %962
        %v965 = vmul.f32 %v909, %v948
        %v966 = vmul.f32 %v910, %v948
        %v967 = vmul.f32 %v911, %v948
        %v968 = vmul.f32 %v912, %v948
        %v969 = vmul.f32 %v913, %v948
        %v970 = vmul.f32 %v914, %v948
        %v971 = vmul.f32 %v915, %v948
        %v972 = vmul.f32 %v916, %v948
        %v973 = vmul.f32 %v917, %v953
        %v974 = vmul.f32 %v918, %v953
        %v975 = vmul.f32 %v919, %v953
        %v976 = vmul.f32 %v920, %v953
        %v977 = vmul.f32 %v921, %v953
        %v978 = vmul.f32 %v922, %v953
        %v979 = vmul.f32 %v923, %v953
        %v980 = vmul.f32 %v924, %v953
        %v981 = vmul.f32 %v925, %v958
        %v982 = vmul.f32 %v926, %v958
        %v983 = vmul.f32 %v927, %v958
        %v984 = vmul.f32 %v928, %v958
        %v985 = vmul.f32 %v929, %v958
        %v986 = vmul.f32 %v930, %v958
        %v987 = vmul.f32 %v931, %v958
        %v988 = vmul.f32 %v932, %v958
        %v989 = vmul.f32 %v933, %v963
        %v990 = vmul.f32 %v934, %v963
        %v991 = vmul.f32 %v935, %v963
        %v992 = vmul.f32 %v936, %v963
        %v993 = vmul.f32 %v937, %v963
        %v994 = vmul.f32 %v938, %v963
        %v995 = vmul.f32 %v939, %v963
        %v996 = vmul.f32 %v940, %v963
        %v997 = vld [vmem:[%s6] sm:$0xff]
        %v998 = vld [vmem:[%s6 + $0x8] sm:$0xff]
        %v999 = vld [vmem:[%s6 + $0x10] sm:$0xff]
        %v1000 = vld [vmem:[%s6 + $0x18] sm:$0xff]
        %1002 = vset.pattern.permute.xlu0 0
        %1003 = vperm.xlu0 %1002, %v997
        %v1004 = vpop.permute.xlu0 %1003
        %1007 = vset.pattern.permute.xlu0 0
        %1008 = vperm.xlu0 %1007, %v998
        %v1009 = vpop.permute.xlu0 %1008
        %1012 = vset.pattern.permute.xlu0 0
        %1013 = vperm.xlu0 %1012, %v999
        %v1014 = vpop.permute.xlu0 %1013
        %1017 = vset.pattern.permute.xlu0 0
        %1018 = vperm.xlu0 %1017, %v1000
        %v1019 = vpop.permute.xlu0 %1018
        %v1021 = vadd.f32 %v965, %v1004
        %v1022 = vadd.f32 %v966, %v1004
        %v1023 = vadd.f32 %v967, %v1004
        %v1024 = vadd.f32 %v968, %v1004
        %v1025 = vadd.f32 %v969, %v1004
        %v1026 = vadd.f32 %v970, %v1004
        %v1027 = vadd.f32 %v971, %v1004
        %v1028 = vadd.f32 %v972, %v1004
        %v1029 = vadd.f32 %v973, %v1009
        %v1030 = vadd.f32 %v974, %v1009
        %v1031 = vadd.f32 %v975, %v1009
        %v1032 = vadd.f32 %v976, %v1009
        %v1033 = vadd.f32 %v977, %v1009
        %v1034 = vadd.f32 %v978, %v1009
        %v1035 = vadd.f32 %v979, %v1009
        %v1036 = vadd.f32 %v980, %v1009
        %v1037 = vadd.f32 %v981, %v1014
        %v1038 = vadd.f32 %v982, %v1014
        %v1039 = vadd.f32 %v983, %v1014
        %v1040 = vadd.f32 %v984, %v1014
        %v1041 = vadd.f32 %v985, %v1014
        %v1042 = vadd.f32 %v986, %v1014
        %v1043 = vadd.f32 %v987, %v1014
        %v1044 = vadd.f32 %v988, %v1014
        %v1045 = vadd.f32 %v989, %v1019
        %v1046 = vadd.f32 %v990, %v1019
        %v1047 = vadd.f32 %v991, %v1019
        %v1048 = vadd.f32 %v992, %v1019
        %v1049 = vadd.f32 %v993, %v1019
        %v1050 = vadd.f32 %v994, %v1019
        %v1051 = vadd.f32 %v995, %v1019
        %v1052 = vadd.f32 %v996, %v1019
        %v1053 = vmax.f32 %v1021, 0.0
        %v1054 = vmax.f32 %v1022, 0.0
        %v1055 = vmax.f32 %v1023, 0.0
        %v1056 = vmax.f32 %v1024, 0.0
        %v1057 = vmax.f32 %v1025, 0.0
        %v1058 = vmax.f32 %v1026, 0.0
        %v1059 = vmax.f32 %v1027, 0.0
        %v1060 = vmax.f32 %v1028, 0.0
        %v1061 = vmax.f32 %v1029, 0.0
        %v1062 = vmax.f32 %v1030, 0.0
        %v1063 = vmax.f32 %v1031, 0.0
        %v1064 = vmax.f32 %v1032, 0.0
        %v1065 = vmax.f32 %v1033, 0.0
        %v1066 = vmax.f32 %v1034, 0.0
        %v1067 = vmax.f32 %v1035, 0.0
        %v1068 = vmax.f32 %v1036, 0.0
        %v1069 = vmax.f32 %v1037, 0.0
        %v1070 = vmax.f32 %v1038, 0.0
        %v1071 = vmax.f32 %v1039, 0.0
        %v1072 = vmax.f32 %v1040, 0.0
        %v1073 = vmax.f32 %v1041, 0.0
        %v1074 = vmax.f32 %v1042, 0.0
        %v1075 = vmax.f32 %v1043, 0.0
        %v1076 = vmax.f32 %v1044, 0.0
        %v1077 = vmax.f32 %v1045, 0.0
        %v1078 = vmax.f32 %v1046, 0.0
        %v1079 = vmax.f32 %v1047, 0.0
        %v1080 = vmax.f32 %v1048, 0.0
        %v1081 = vmax.f32 %v1049, 0.0
        %v1082 = vmax.f32 %v1050, 0.0
        %v1083 = vmax.f32 %v1051, 0.0
        %v1084 = vmax.f32 %v1052, 0.0
        %v1085 = vmin.f32 %v1053, 6.0
        %v1086 = vmin.f32 %v1054, 6.0
        %v1087 = vmin.f32 %v1055, 6.0
        %v1088 = vmin.f32 %v1056, 6.0
        %v1089 = vmin.f32 %v1057, 6.0
        %v1090 = vmin.f32 %v1058, 6.0
        %v1091 = vmin.f32 %v1059, 6.0
        %v1092 = vmin.f32 %v1060, 6.0
        %v1093 = vmin.f32 %v1061, 6.0
        %v1094 = vmin.f32 %v1062, 6.0
        %v1095 = vmin.f32 %v1063, 6.0
        %v1096 = vmin.f32 %v1064, 6.0
        %v1097 = vmin.f32 %v1065, 6.0
        %v1098 = vmin.f32 %v1066, 6.0
        %v1099 = vmin.f32 %v1067, 6.0
        %v1100 = vmin.f32 %v1068, 6.0
        %v1101 = vmin.f32 %v1069, 6.0
        %v1102 = vmin.f32 %v1070, 6.0
        %v1103 = vmin.f32 %v1071, 6.0
        %v1104 = vmin.f32 %v1072, 6.0
        %v1105 = vmin.f32 %v1073, 6.0
        %v1106 = vmin.f32 %v1074, 6.0
        %v1107 = vmin.f32 %v1075, 6.0
        %v1108 = vmin.f32 %v1076, 6.0
        %v1109 = vmin.f32 %v1077, 6.0
        %v1110 = vmin.f32 %v1078, 6.0
        %v1111 = vmin.f32 %v1079, 6.0
        %v1112 = vmin.f32 %v1080, 6.0
        %v1113 = vmin.f32 %v1081, 6.0
        %v1114 = vmin.f32 %v1082, 6.0
        %v1115 = vmin.f32 %v1083, 6.0
        %v1116 = vmin.f32 %v1084, 6.0
        %1117 = vst [vmem:[%s275] sm:$0xff] %v1085
        %1118 = vst [vmem:[%s275 + $0x8] sm:$0xff] %v1086
        %1119 = vst [vmem:[%s275 + $0x10] sm:$0xff] %v1087
        %1120 = vst [vmem:[%s275 + $0x18] sm:$0xff] %v1088
        %1121 = vst [vmem:[%s275 + $0x20] sm:$0xff] %v1089
        %1122 = vst [vmem:[%s275 + $0x28] sm:$0xff] %v1090
        %1123 = vst [vmem:[%s275 + $0x30] sm:$0xff] %v1091
        %1124 = vst [vmem:[%s275 + $0x38] sm:$0xff] %v1092
        %1125 = vst [vmem:[%s275 + $0x40] sm:$0xff] %v1093
        %1126 = vst [vmem:[%s275 + $0x48] sm:$0xff] %v1094
        %1127 = vst [vmem:[%s275 + $0x50] sm:$0xff] %v1095
        %1128 = vst [vmem:[%s275 + $0x58] sm:$0xff] %v1096
        %1129 = vst [vmem:[%s275 + $0x60] sm:$0xff] %v1097
        %1130 = vst [vmem:[%s275 + $0x68] sm:$0xff] %v1098
        %1131 = vst [vmem:[%s275 + $0x70] sm:$0xff] %v1099
        %1132 = vst [vmem:[%s275 + $0x78] sm:$0xff] %v1100
        %1133 = vst [vmem:[%s275 + $0x80] sm:$0xff] %v1101
        %1134 = vst [vmem:[%s275 + $0x88] sm:$0xff] %v1102
        %1135 = vst [vmem:[%s275 + $0x90] sm:$0xff] %v1103
        %1136 = vst [vmem:[%s275 + $0x98] sm:$0xff] %v1104
        %1137 = vst [vmem:[%s275 + $0xa0] sm:$0xff] %v1105
        %1138 = vst [vmem:[%s275 + $0xa8] sm:$0xff] %v1106
        %1139 = vst [vmem:[%s275 + $0xb0] sm:$0xff] %v1107
        %1140 = vst [vmem:[%s275 + $0xb8] sm:$0xff] %v1108
        %1141 = vst [vmem:[%s275 + $0xc0] sm:$0xff] %v1109
        %1142 = vst [vmem:[%s275 + $0xc8] sm:$0xff] %v1110
        %1143 = vst [vmem:[%s275 + $0xd0] sm:$0xff] %v1111
        %1144 = vst [vmem:[%s275 + $0xd8] sm:$0xff] %v1112
        %1145 = vst [vmem:[%s275 + $0xe0] sm:$0xff] %v1113
        %1146 = vst [vmem:[%s275 + $0xe8] sm:$0xff] %v1114
        %1147 = vst [vmem:[%s275 + $0xf0] sm:$0xff] %v1115
        %1148 = vst [vmem:[%s275 + $0xf8] sm:$0xff] %v1116
        %s1149 = sand.u32 %s185, 1
        %s1150 = scalar_lea.sflag [#allocation5], %s1149
        %s1151 = sand.u32 %s185, 1
        %s1152 = smul.addr %s1151, 256
        %s1153 = scalar_lea.vmem [#allocation4], %s1152
        // Predicated region
        $region49: #{tpu_custom_call.1} parent=47 // pred_check
          %p1154 = pneg %p195
        $region50: #{tpu_custom_call.1} parent=47 // pred_check_branch
          %1156 = sbr.rel (%p1154) target = $region52
        $region51: #{tpu_custom_call.1} parent=47 // pred_region
          %s1158 = ssub.s32 4096, 4096
          %1159 = vsyncadd %s1150, %s1158
          %s1160 = smul.addr %s25, 32
          %s1161 = smul.addr %s1160, 128
          %s1162 = scalar_lea.hbm %s7, %s1161
          %s1163 = sshll.u32 %s1153, 4
          %s1164 = int_to_ptr.vmem [resolvable:$true] %s1163
          %1169 = dma.vmem_to_hbm [thread:$0]  %s1164, 4096, %s1162, %s1150, 1024, 1024, 64
        $region52: #{tpu_custom_call.1} parent=47 // pred_fallthru
          _
      $region48: #{tpu_custom_call.1} parent=5 // pred_fallthru
        _
      %p1170 = scmp.le.s32.totalorder 2, %s20
      // Predicated region
      $region53: #{tpu_custom_call.1} parent=5 // pred_check
        %p1171 = pneg %p1170
      $region54: #{tpu_custom_call.1} parent=5 // pred_check_branch
        %1173 = sbr.rel (%p1171) target = $region56
      $region55: #{tpu_custom_call.1} parent=5 // pred_region
        %s1174 = ssub.s32 %s20, 2
        // Predicated region
        $region57: #{tpu_custom_call.1} parent=55 // pred_check
          %p1175 = pneg %p201
        $region58: #{tpu_custom_call.1} parent=55 // pred_check_branch
          %1177 = sbr.rel (%p1175) target = $region60
        $region59: #{tpu_custom_call.1} parent=55 // pred_region
          %s1178 = sand.u32 %s186, 1
          %s1179 = scalar_lea.sflag [#allocation5], %s1178
          %s1180 = sand.u32 %s186, 1
          %s1181 = smul.addr %s1180, 256
          %s1182 = scalar_lea.vmem [#allocation4], %s1181
          %1183 = dma.done %s1179, 4096
        $region60: #{tpu_custom_call.1} parent=55 // pred_fallthru
          _
      $region56: #{tpu_custom_call.1} parent=5 // pred_fallthru
        _
    $region6: #{tpu_custom_call.1} parent=1 // loop_footer
      %s24 = sadd.s32 1, %s20
    $region7: #{tpu_custom_call.1} parent=1 // loop_footer_branch
      %19 = sbr.rel target = $region3
    $region8: #{tpu_custom_call.1} parent=1 // loop_exit
      _
    %1184 = vsyncpa [#allocation5], 1
    %s1185 = scalar_lea.sflag [#allocation5], 1
    %1186 = vsyncpa %s1185, 1

</llo_original>
